<compile_context>
chip_gen: v7x
topology: tpu7x:2x2x1
jax: 0.10.0
libtpu: 0.0.40
codegen_flags: <defaults>
</compile_context>

<pallas_src>
import numpy as np

import jax
import jax.numpy as jnp
from jax.experimental import pallas as pl
from jax.experimental.pallas import tpu as pltpu

MIN_TILE_B = 16    # bf16 sublane-packing quantum
MAX_TILE_B = 256   # fills one 256-row MXU pass (v6e/v7x); fits v7x VMEM

_WEIGHT_ORDER = ("conv1_t", "conv1_b", "pool1_m",
                 "conv2_t", "conv2_b", "pool2_m",
                 "fc1_w", "fc1_b", "fc2_w", "fc2_b", "fc3_w", "fc3_b")


def _round_up(x, m):
    return ((x + m - 1) // m) * m


def _pick_tile_b(batch):
    tb = min(MAX_TILE_B, _round_up(batch, MIN_TILE_B))
    # v7x megacore: if one max-size tile would cover the whole batch, split it
    # into two 128-row tiles so the "parallel" grid axis spans both TCs.
    if tb == MAX_TILE_B and _round_up(batch, tb) == tb:
        tb = MAX_TILE_B // 2
    return tb


# ----------------------------------------------------------------------------
# Host-side weight preparation (one time, plain numpy/JAX)
# ----------------------------------------------------------------------------
def _conv_toeplitz(w_oihw, w_in, w_out):
    """Per-kh matrices T[kh] of shape (ci*w_in, co*w_out) with
    T[kh][ci*w_in + w, co*w_out + wo] = w[co, ci, kh, w - wo] (0 <= w-wo < kW)."""
    co_n, ci_n, kh_n, kw_n = w_oihw.shape
    w = np.asarray(w_oihw, np.float32)
    t = np.zeros((kh_n, ci_n, w_in, co_n, w_out), np.float32)
    for kh in range(kh_n):
        for kw in range(kw_n):
            for wo in range(w_out):
                t[kh, :, wo + kw, :, wo] = w[:, :, kh, kw].T  # (ci, co)
    return t.reshape(kh_n, ci_n * w_in, co_n * w_out)


def _pool_matrix(c_n, w_in):
    """(c*w_in, c*w_out) matrix averaging width pairs per channel.  Entries are
    0.25: the H-direction half of the 2x2 average is folded in here so the
    kernel only does a pair-SUM on the VPU (no extra 0.5 multiply)."""
    w_out = w_in // 2
    p = np.zeros((c_n, w_in, c_n, w_out), np.float32)
    for c in range(c_n):
        for wo in range(w_out):
            p[c, 2 * wo, c, wo] = 0.25
            p[c, 2 * wo + 1, c, wo] = 0.25
    return p.reshape(c_n * w_in, c_n * w_out)


def init_params(key):
    """Synthetic parameters in the torch layouts (OIHW conv, (out,in) linear)."""
    ks = jax.random.split(key, 10)
    s = 0.1
    n = jax.random.normal
    return {
        "conv1_w": s * n(ks[0], (6, 1, 5, 5), jnp.float32),
        "conv1_b": s * n(ks[1], (6,), jnp.float32),
        "conv2_w": s * n(ks[2], (16, 6, 5, 5), jnp.float32),
        "conv2_b": s * n(ks[3], (16,), jnp.float32),
        "fc1_w": s * n(ks[4], (120, 400), jnp.float32),   # input order = CHW flatten
        "fc1_b": s * n(ks[5], (120,), jnp.float32),
        "fc2_w": s * n(ks[6], (84, 120), jnp.float32),
        "fc2_b": s * n(ks[7], (84,), jnp.float32),
        "fc3_w": s * n(ks[8], (10, 84), jnp.float32),
        "fc3_b": s * n(ks[9], (10,), jnp.float32),
    }


def prepare_params(params):
    """One-time relayout of torch-shaped params into kernel operands."""
    p = {k: np.asarray(v, np.float32) for k, v in params.items()}
    bf16 = jnp.bfloat16

    # kh-folded Toeplitz matrices: K axis is (kh, ci, w), matching the
    # lane-concatenated row windows built inside the kernel.
    conv1_t = _conv_toeplitz(p["conv1_w"], w_in=32, w_out=28).reshape(5 * 32, 6 * 28)
    conv2_t = _conv_toeplitz(p["conv2_w"], w_in=14, w_out=10).reshape(5 * 84, 16 * 10)
    pool1_m = _pool_matrix(6, 28)                               # (168, 84)
    pool2_m = _pool_matrix(16, 10)                              # (160, 80)

    # fc1: fold torch's CHW flatten into the weight layout -> rows = h*80 + c*5 + w,
    # matching the lane-concatenated (tb, 400) activation built in the kernel.
    fc1 = p["fc1_w"].reshape(120, 16, 5, 5).transpose(2, 1, 3, 0).reshape(5 * 80, 120)
    fc2 = p["fc2_w"].T                                          # (120, 84)
    fc3 = np.zeros((84, 128), np.float32)                       # lane-padded to 128
    fc3[:, :10] = p["fc3_w"].T
    fc3_b = np.zeros((128,), np.float32)
    fc3_b[:10] = p["fc3_b"]

    return {
        "conv1_t": jnp.asarray(conv1_t, bf16),
        "conv1_b": jnp.asarray(np.repeat(p["conv1_b"], 28)[None, :], jnp.float32),
        "pool1_m": jnp.asarray(pool1_m, bf16),
        "conv2_t": jnp.asarray(conv2_t, bf16),
        "conv2_b": jnp.asarray(np.repeat(p["conv2_b"], 10)[None, :], jnp.float32),
        "pool2_m": jnp.asarray(pool2_m, bf16),
        "fc1_w": jnp.asarray(fc1, bf16),
        "fc1_b": jnp.asarray(p["fc1_b"][None, :], jnp.float32),
        "fc2_w": jnp.asarray(fc2, bf16),
        "fc2_b": jnp.asarray(p["fc2_b"][None, :], jnp.float32),
        "fc3_w": jnp.asarray(fc3, bf16),
        "fc3_b": jnp.asarray(fc3_b[None, :], jnp.float32),
    }


# ----------------------------------------------------------------------------
# Fused Pallas kernel: whole LeNet-5 forward for one batch tile
# ----------------------------------------------------------------------------
def _lenet5_kernel(x_ref,
                   c1t_ref, c1b_ref, p1m_ref,
                   c2t_ref, c2b_ref, p2m_ref,
                   f1w_ref, f1b_ref, f2w_ref, f2b_ref, f3w_ref, f3b_ref,
                   out_ref):
    tb = x_ref.shape[1]                      # batch tile (multiple of 16)
    f32, bf16 = jnp.float32, jnp.bfloat16

    # ---- conv1 (5x5, pad=2, 1->6) + ReLU : ONE wide-K Toeplitz matmul ----
    # x rows are ordered h*tb + b; the 5 shifted kh row windows are lane-
    # concatenated into K=160 so the MXU does a single pass instead of 5.
    x = x_ref[...].reshape(32 * tb, 32)                        # bf16
    x_stk = jnp.concatenate([x[kh * tb:(kh + 28) * tb] for kh in range(5)], axis=-1)
    a1 = jnp.dot(x_stk, c1t_ref[...], preferred_element_type=f32)
    a1 = jnp.maximum(a1 + c1b_ref[...], 0.0)                   # (28*tb, 6*28)

    # ---- avgpool1 2x2: H = pairwise 8-aligned block SUM, W = 0.25-matmul ----
    a1 = a1.reshape(14, 2 * tb, 6 * 28)
    a1 = a1[:, :tb, :] + a1[:, tb:, :]                         # (14, tb, 168)
    p1 = jnp.dot(a1.reshape(14 * tb, 6 * 28).astype(bf16), p1m_ref[...],
                 preferred_element_type=f32)                   # (14*tb, 6*14)

    # ---- conv2 (5x5, valid, 6->16) + ReLU : kh folded into K=420 ----
    p1 = p1.astype(bf16)
    p1_stk = jnp.concatenate([p1[kh * tb:(kh + 10) * tb] for kh in range(5)], axis=-1)
    a2 = jnp.dot(p1_stk, c2t_ref[...], preferred_element_type=f32)
    a2 = jnp.maximum(a2 + c2b_ref[...], 0.0)                   # (10*tb, 16*10)

    # ---- avgpool2 2x2 ----
    a2 = a2.reshape(5, 2 * tb, 16 * 10)
    a2 = a2[:, :tb, :] + a2[:, tb:, :]                         # (5, tb, 160)
    p2 = jnp.dot(a2.reshape(5 * tb, 16 * 10).astype(bf16), p2m_ref[...],
                 preferred_element_type=f32)                   # (5*tb, 16*5)

    # ---- fc1 (400->120) + ReLU: flatten folded into weights, one K=400 dot ----
    p2 = p2.astype(bf16)
    p2_stk = jnp.concatenate([p2[hh * tb:(hh + 1) * tb] for hh in range(5)], axis=-1)
    h1 = jnp.dot(p2_stk, f1w_ref[...], preferred_element_type=f32)
    h1 = jnp.maximum(h1 + f1b_ref[...], 0.0)                   # (tb, 120)

    # ---- fc2 (120->84) + ReLU ----
    h2 = jnp.dot(h1.astype(bf16), f2w_ref[...], preferred_element_type=f32)
    h2 = jnp.maximum(h2 + f2b_ref[...], 0.0)                   # (tb, 84)

    # ---- fc3 (84->10, zero-padded to 128 lanes for a dense store) ----
    out = jnp.dot(h2.astype(bf16), f3w_ref[...], preferred_element_type=f32)
    out_ref[...] = out + f3b_ref[...]                          # (tb, 128)


# ----------------------------------------------------------------------------
# Wrapper
# ----------------------------------------------------------------------------
@jax.jit
def lenet5_forward(kparams, x_nchw):
    B = x_nchw.shape[0]
    tile_b = _pick_tile_b(B)
    b_pad = _round_up(B, tile_b)

    # Input layout prep in bf16 (cast fused with transpose+pad -> half HBM
    # traffic): (B,1,28,28) -> (H=32, B_pad, W=32), zero-padded spatially
    # (conv1 padding=2) and on the batch to a multiple of the tile.
    x = x_nchw.reshape(B, 28, 28).astype(jnp.bfloat16)
    x = jnp.transpose(x, (1, 0, 2))                            # (28, B, 28)
    x = jnp.pad(x, ((2, 2), (0, b_pad - B), (2, 2)))           # (32, b_pad, 32)

    def full_spec(arr):
        nd = arr.ndim
        return pl.BlockSpec(arr.shape, lambda i, _nd=nd: (0,) * _nd)

    kp = kparams
    out = pl.pallas_call(
        _lenet5_kernel,
        out_shape=jax.ShapeDtypeStruct((b_pad, 128), jnp.float32),
        grid=(b_pad // tile_b,),
        in_specs=[pl.BlockSpec((32, tile_b, 32), lambda i: (0, i, 0))]
                + [full_spec(kp[name]) for name in _WEIGHT_ORDER],
        out_specs=pl.BlockSpec((tile_b, 128), lambda i: (i, 0)),
        compiler_params=pltpu.CompilerParams(
            dimension_semantics=("parallel",),
            vmem_limit_bytes=40 * 1024 * 1024,   # headroom for TILE_B=256, <64MiB (v7x)
        ),
    )(x, *(kp[name] for name in _WEIGHT_ORDER))

    return out[:B, :10]


# ----------------------------------------------------------------------------
# Pure-JAX reference (torch semantics) for a correctness sanity check
# ----------------------------------------------------------------------------
def lenet5_reference(params, x_nchw):
    x = x_nchw.astype(jnp.float32)
    y = jax.lax.conv_general_dilated(
        x, params["conv1_w"], (1, 1), ((2, 2), (2, 2)),
        dimension_numbers=("NCHW", "OIHW", "NCHW"))
    y = jax.nn.relu(y + params["conv1_b"][None, :, None, None])
    y = 0.25 * jax.lax.reduce_window(y, 0.0, jax.lax.add,
                                     (1, 1, 2, 2), (1, 1, 2, 2), "VALID")
    y = jax.lax.conv_general_dilated(
        y, params["conv2_w"], (1, 1), ((0, 0), (0, 0)),
        dimension_numbers=("NCHW", "OIHW", "NCHW"))
    y = jax.nn.relu(y + params["conv2_b"][None, :, None, None])
    y = 0.25 * jax.lax.reduce_window(y, 0.0, jax.lax.add,
                                     (1, 1, 2, 2), (1, 1, 2, 2), "VALID")
    y = y.reshape(y.shape[0], -1)                      # CHW flatten (torch order)
    y = jax.nn.relu(y @ params["fc1_w"].T + params["fc1_b"])
    y = jax.nn.relu(y @ params["fc2_w"].T + params["fc2_b"])
    return y @ params["fc3_w"].T + params["fc3_b"]


if __name__ == "__main__":
    key = jax.random.PRNGKey(0)
    k_x, k_p = jax.random.split(key)
    B = 2
    # MNIST-shaped input (required for the 16*5*5 = 400 flatten dimension).
    x = jax.random.normal(k_x, (B, 1, 28, 28), dtype=jnp.float32)

    raw_params = init_params(k_p)
    kparams = prepare_params(raw_params)

    out = lenet5_forward(kparams, x)
    out = jax.block_until_ready(out)
    assert out.shape == (B, 10), out.shape
    assert out.dtype == jnp.float32
    assert bool(jnp.all(jnp.isfinite(out)))

    # Sanity check against the f32 XLA reference (bf16 MXU inputs -> loose tol).
    ref = lenet5_reference(raw_params, x)
    err = float(jnp.max(jnp.abs(out - ref)))
    assert err < 5e-2, f"max abs error vs reference: {err}"

    print("KERNEL_OK")
</pallas_src>

<mosaic_0001>
module attributes {stable_mosaic.version = 11 : i64} {
  func.func @_lenet5_kernel(%arg0: i32, %arg1: memref<32x16x32xbf16, #tpu.memory_space<vmem>>, %arg2: memref<160x168xbf16, #tpu.memory_space<vmem>>, %arg3: memref<1x168xf32, #tpu.memory_space<vmem>>, %arg4: memref<168x84xbf16, #tpu.memory_space<vmem>>, %arg5: memref<420x160xbf16, #tpu.memory_space<vmem>>, %arg6: memref<1x160xf32, #tpu.memory_space<vmem>>, %arg7: memref<160x80xbf16, #tpu.memory_space<vmem>>, %arg8: memref<400x120xbf16, #tpu.memory_space<vmem>>, %arg9: memref<1x120xf32, #tpu.memory_space<vmem>>, %arg10: memref<120x84xbf16, #tpu.memory_space<vmem>>, %arg11: memref<1x84xf32, #tpu.memory_space<vmem>>, %arg12: memref<84x128xbf16, #tpu.memory_space<vmem>>, %arg13: memref<1x128xf32, #tpu.memory_space<vmem>>, %arg14: memref<16x128xf32, #tpu.memory_space<vmem>>) attributes {dimension_semantics = [#tpu.dimension_semantics<parallel>], iteration_bounds = array<i64: 1>, scalar_prefetch = 0 : i64, scratch_operands = 0 : i64, tpu.core_type = #tpu.core_type<tc>, window_params = [{transform_indices = @transform_0, window_bounds = array<i64: 32, 16, 32>}, {pipeline_mode = #tpu.pipeline_mode<synchronous>, transform_indices = @transform_1, window_bounds = array<i64: 160, 168>}, {pipeline_mode = #tpu.pipeline_mode<synchronous>, transform_indices = @transform_2, window_bounds = array<i64: 1, 168>}, {pipeline_mode = #tpu.pipeline_mode<synchronous>, transform_indices = @transform_3, window_bounds = array<i64: 168, 84>}, {pipeline_mode = #tpu.pipeline_mode<synchronous>, transform_indices = @transform_4, window_bounds = array<i64: 420, 160>}, {pipeline_mode = #tpu.pipeline_mode<synchronous>, transform_indices = @transform_5, window_bounds = array<i64: 1, 160>}, {pipeline_mode = #tpu.pipeline_mode<synchronous>, transform_indices = @transform_6, window_bounds = array<i64: 160, 80>}, {pipeline_mode = #tpu.pipeline_mode<synchronous>, transform_indices = @transform_7, window_bounds = array<i64: 400, 120>}, {pipeline_mode = #tpu.pipeline_mode<synchronous>, transform_indices = @transform_8, window_bounds = array<i64: 1, 120>}, {pipeline_mode = #tpu.pipeline_mode<synchronous>, transform_indices = @transform_9, window_bounds = array<i64: 120, 84>}, {pipeline_mode = #tpu.pipeline_mode<synchronous>, transform_indices = @transform_10, window_bounds = array<i64: 1, 84>}, {pipeline_mode = #tpu.pipeline_mode<synchronous>, transform_indices = @transform_11, window_bounds = array<i64: 84, 128>}, {pipeline_mode = #tpu.pipeline_mode<synchronous>, transform_indices = @transform_12, window_bounds = array<i64: 1, 128>}, {transform_indices = @transform_13, window_bounds = array<i64: 16, 128>}]} {
    %c0 = arith.constant 0 : index
    %c0_0 = arith.constant 0 : index
    %c0_1 = arith.constant 0 : index
    %0 = vector.load %arg1[%c0, %c0_0, %c0_1] : memref<32x16x32xbf16, #tpu.memory_space<vmem>>, vector<32x16x32xbf16>
    %1 = vector.shape_cast %0 : vector<32x16x32xbf16> to vector<512x32xbf16>
    %2 = vector.extract_strided_slice %1 {offsets = [0, 0], sizes = [448, 32], strides = [1, 1]} : vector<512x32xbf16> to vector<448x32xbf16>
    %3 = vector.extract_strided_slice %1 {offsets = [16, 0], sizes = [448, 32], strides = [1, 1]} : vector<512x32xbf16> to vector<448x32xbf16>
    %4 = vector.extract_strided_slice %1 {offsets = [32, 0], sizes = [448, 32], strides = [1, 1]} : vector<512x32xbf16> to vector<448x32xbf16>
    %5 = vector.extract_strided_slice %1 {offsets = [48, 0], sizes = [448, 32], strides = [1, 1]} : vector<512x32xbf16> to vector<448x32xbf16>
    %6 = vector.extract_strided_slice %1 {offsets = [64, 0], sizes = [448, 32], strides = [1, 1]} : vector<512x32xbf16> to vector<448x32xbf16>
    %7 = tpu.concatenate %2, %3, %4, %5, %6 in 1 : vector<448x32xbf16>, vector<448x32xbf16>, vector<448x32xbf16>, vector<448x32xbf16>, vector<448x32xbf16> -> vector<448x160xbf16>
    %c0_2 = arith.constant 0 : index
    %c0_3 = arith.constant 0 : index
    %8 = vector.load %arg2[%c0_2, %c0_3] : memref<160x168xbf16, #tpu.memory_space<vmem>>, vector<160x168xbf16>
    %cst = arith.constant dense<0.000000e+00> : vector<448x168xf32>
    %9 = tpu.matmul %7, %8, %cst {dimension_numbers = #tpu.dot_dimension_numbers<[1], [0], [0], [1], [0, 0, 1, 1], [], []>} : vector<448x160xbf16>, vector<160x168xbf16>, vector<448x168xf32> -> vector<448x168xf32>
    %c0_4 = arith.constant 0 : index
    %c0_5 = arith.constant 0 : index
    %10 = vector.load %arg3[%c0_4, %c0_5] : memref<1x168xf32, #tpu.memory_space<vmem>>, vector<1x168xf32>
    %11 = vector.broadcast %10 : vector<1x168xf32> to vector<448x168xf32>
    %12 = arith.addf %9, %11 : vector<448x168xf32>
    %cst_6 = arith.constant 0.000000e+00 : f32
    %13 = vector.broadcast %cst_6 : f32 to vector<448x168xf32>
    %14 = arith.maximumf %12, %13 : vector<448x168xf32>
    %15 = vector.shape_cast %14 : vector<448x168xf32> to vector<14x32x168xf32>
    %16 = vector.extract_strided_slice %15 {offsets = [0, 0, 0], sizes = [14, 16, 168], strides = [1, 1, 1]} : vector<14x32x168xf32> to vector<14x16x168xf32>
    %17 = vector.extract_strided_slice %15 {offsets = [0, 16, 0], sizes = [14, 16, 168], strides = [1, 1, 1]} : vector<14x32x168xf32> to vector<14x16x168xf32>
    %18 = arith.addf %16, %17 : vector<14x16x168xf32>
    %19 = vector.shape_cast %18 : vector<14x16x168xf32> to vector<224x168xf32>
    %20 = arith.truncf %19 : vector<224x168xf32> to vector<224x168xbf16>
    %c0_7 = arith.constant 0 : index
    %c0_8 = arith.constant 0 : index
    %21 = vector.load %arg4[%c0_7, %c0_8] : memref<168x84xbf16, #tpu.memory_space<vmem>>, vector<168x84xbf16>
    %cst_9 = arith.constant dense<0.000000e+00> : vector<224x84xf32>
    %22 = tpu.matmul %20, %21, %cst_9 {dimension_numbers = #tpu.dot_dimension_numbers<[1], [0], [0], [1], [0, 0, 1, 1], [], []>} : vector<224x168xbf16>, vector<168x84xbf16>, vector<224x84xf32> -> vector<224x84xf32>
    %23 = arith.truncf %22 : vector<224x84xf32> to vector<224x84xbf16>
    %24 = vector.extract_strided_slice %23 {offsets = [0, 0], sizes = [160, 84], strides = [1, 1]} : vector<224x84xbf16> to vector<160x84xbf16>
    %25 = vector.extract_strided_slice %23 {offsets = [16, 0], sizes = [160, 84], strides = [1, 1]} : vector<224x84xbf16> to vector<160x84xbf16>
    %26 = vector.extract_strided_slice %23 {offsets = [32, 0], sizes = [160, 84], strides = [1, 1]} : vector<224x84xbf16> to vector<160x84xbf16>
    %27 = vector.extract_strided_slice %23 {offsets = [48, 0], sizes = [160, 84], strides = [1, 1]} : vector<224x84xbf16> to vector<160x84xbf16>
    %28 = vector.extract_strided_slice %23 {offsets = [64, 0], sizes = [160, 84], strides = [1, 1]} : vector<224x84xbf16> to vector<160x84xbf16>
    %29 = tpu.concatenate %24, %25, %26, %27, %28 in 1 : vector<160x84xbf16>, vector<160x84xbf16>, vector<160x84xbf16>, vector<160x84xbf16>, vector<160x84xbf16> -> vector<160x420xbf16>
    %c0_10 = arith.constant 0 : index
    %c0_11 = arith.constant 0 : index
    %30 = vector.load %arg5[%c0_10, %c0_11] : memref<420x160xbf16, #tpu.memory_space<vmem>>, vector<420x160xbf16>
    %cst_12 = arith.constant dense<0.000000e+00> : vector<160x160xf32>
    %31 = tpu.matmul %29, %30, %cst_12 {dimension_numbers = #tpu.dot_dimension_numbers<[1], [0], [0], [1], [0, 0, 1, 1], [], []>} : vector<160x420xbf16>, vector<420x160xbf16>, vector<160x160xf32> -> vector<160x160xf32>
    %c0_13 = arith.constant 0 : index
    %c0_14 = arith.constant 0 : index
    %32 = vector.load %arg6[%c0_13, %c0_14] : memref<1x160xf32, #tpu.memory_space<vmem>>, vector<1x160xf32>
    %33 = vector.broadcast %32 : vector<1x160xf32> to vector<160x160xf32>
    %34 = arith.addf %31, %33 : vector<160x160xf32>
    %cst_15 = arith.constant 0.000000e+00 : f32
    %35 = vector.broadcast %cst_15 : f32 to vector<160x160xf32>
    %36 = arith.maximumf %34, %35 : vector<160x160xf32>
    %37 = vector.shape_cast %36 : vector<160x160xf32> to vector<5x32x160xf32>
    %38 = vector.extract_strided_slice %37 {offsets = [0, 0, 0], sizes = [5, 16, 160], strides = [1, 1, 1]} : vector<5x32x160xf32> to vector<5x16x160xf32>
    %39 = vector.extract_strided_slice %37 {offsets = [0, 16, 0], sizes = [5, 16, 160], strides = [1, 1, 1]} : vector<5x32x160xf32> to vector<5x16x160xf32>
    %40 = arith.addf %38, %39 : vector<5x16x160xf32>
    %41 = vector.shape_cast %40 : vector<5x16x160xf32> to vector<80x160xf32>
    %42 = arith.truncf %41 : vector<80x160xf32> to vector<80x160xbf16>
    %c0_16 = arith.constant 0 : index
    %c0_17 = arith.constant 0 : index
    %43 = vector.load %arg7[%c0_16, %c0_17] : memref<160x80xbf16, #tpu.memory_space<vmem>>, vector<160x80xbf16>
    %cst_18 = arith.constant dense<0.000000e+00> : vector<80x80xf32>
    %44 = tpu.matmul %42, %43, %cst_18 {dimension_numbers = #tpu.dot_dimension_numbers<[1], [0], [0], [1], [0, 0, 1, 1], [], []>} : vector<80x160xbf16>, vector<160x80xbf16>, vector<80x80xf32> -> vector<80x80xf32>
    %45 = arith.truncf %44 : vector<80x80xf32> to vector<80x80xbf16>
    %46 = vector.extract_strided_slice %45 {offsets = [0, 0], sizes = [16, 80], strides = [1, 1]} : vector<80x80xbf16> to vector<16x80xbf16>
    %47 = vector.extract_strided_slice %45 {offsets = [16, 0], sizes = [16, 80], strides = [1, 1]} : vector<80x80xbf16> to vector<16x80xbf16>
    %48 = vector.extract_strided_slice %45 {offsets = [32, 0], sizes = [16, 80], strides = [1, 1]} : vector<80x80xbf16> to vector<16x80xbf16>
    %49 = vector.extract_strided_slice %45 {offsets = [48, 0], sizes = [16, 80], strides = [1, 1]} : vector<80x80xbf16> to vector<16x80xbf16>
    %50 = vector.extract_strided_slice %45 {offsets = [64, 0], sizes = [16, 80], strides = [1, 1]} : vector<80x80xbf16> to vector<16x80xbf16>
    %51 = tpu.concatenate %46, %47, %48, %49, %50 in 1 : vector<16x80xbf16>, vector<16x80xbf16>, vector<16x80xbf16>, vector<16x80xbf16>, vector<16x80xbf16> -> vector<16x400xbf16>
    %c0_19 = arith.constant 0 : index
    %c0_20 = arith.constant 0 : index
    %52 = vector.load %arg8[%c0_19, %c0_20] : memref<400x120xbf16, #tpu.memory_space<vmem>>, vector<400x120xbf16>
    %cst_21 = arith.constant dense<0.000000e+00> : vector<16x120xf32>
    %53 = tpu.matmul %51, %52, %cst_21 {dimension_numbers = #tpu.dot_dimension_numbers<[1], [0], [0], [1], [0, 0, 1, 1], [], []>} : vector<16x400xbf16>, vector<400x120xbf16>, vector<16x120xf32> -> vector<16x120xf32>
    %c0_22 = arith.constant 0 : index
    %c0_23 = arith.constant 0 : index
    %54 = vector.load %arg9[%c0_22, %c0_23] : memref<1x120xf32, #tpu.memory_space<vmem>>, vector<1x120xf32>
    %55 = vector.broadcast %54 : vector<1x120xf32> to vector<16x120xf32>
    %56 = arith.addf %53, %55 : vector<16x120xf32>
    %cst_24 = arith.constant 0.000000e+00 : f32
    %57 = vector.broadcast %cst_24 : f32 to vector<16x120xf32>
    %58 = arith.maximumf %56, %57 : vector<16x120xf32>
    %59 = arith.truncf %58 : vector<16x120xf32> to vector<16x120xbf16>
    %c0_25 = arith.constant 0 : index
    %c0_26 = arith.constant 0 : index
    %60 = vector.load %arg10[%c0_25, %c0_26] : memref<120x84xbf16, #tpu.memory_space<vmem>>, vector<120x84xbf16>
    %cst_27 = arith.constant dense<0.000000e+00> : vector<16x84xf32>
    %61 = tpu.matmul %59, %60, %cst_27 {dimension_numbers = #tpu.dot_dimension_numbers<[1], [0], [0], [1], [0, 0, 1, 1], [], []>} : vector<16x120xbf16>, vector<120x84xbf16>, vector<16x84xf32> -> vector<16x84xf32>
    %c0_28 = arith.constant 0 : index
    %c0_29 = arith.constant 0 : index
    %62 = vector.load %arg11[%c0_28, %c0_29] : memref<1x84xf32, #tpu.memory_space<vmem>>, vector<1x84xf32>
    %63 = vector.broadcast %62 : vector<1x84xf32> to vector<16x84xf32>
    %64 = arith.addf %61, %63 : vector<16x84xf32>
    %cst_30 = arith.constant 0.000000e+00 : f32
    %65 = vector.broadcast %cst_30 : f32 to vector<16x84xf32>
    %66 = arith.maximumf %64, %65 : vector<16x84xf32>
    %67 = arith.truncf %66 : vector<16x84xf32> to vector<16x84xbf16>
    %c0_31 = arith.constant 0 : index
    %c0_32 = arith.constant 0 : index
    %68 = vector.load %arg12[%c0_31, %c0_32] : memref<84x128xbf16, #tpu.memory_space<vmem>>, vector<84x128xbf16>
    %cst_33 = arith.constant dense<0.000000e+00> : vector<16x128xf32>
    %69 = tpu.matmul %67, %68, %cst_33 {dimension_numbers = #tpu.dot_dimension_numbers<[1], [0], [0], [1], [0, 0, 1, 1], [], []>} : vector<16x84xbf16>, vector<84x128xbf16>, vector<16x128xf32> -> vector<16x128xf32>
    %c0_34 = arith.constant 0 : index
    %c0_35 = arith.constant 0 : index
    %70 = vector.load %arg13[%c0_34, %c0_35] : memref<1x128xf32, #tpu.memory_space<vmem>>, vector<1x128xf32>
    %71 = vector.broadcast %70 : vector<1x128xf32> to vector<16x128xf32>
    %72 = arith.addf %69, %71 : vector<16x128xf32>
    %c0_36 = arith.constant 0 : index
    %c0_37 = arith.constant 0 : index
    %73 = vector.load %arg14[%c0_36, %c0_37] : memref<16x128xf32, #tpu.memory_space<vmem>>, vector<16x128xf32>
    tpu.vector_store %arg14[%c0_36, %c0_37], %72 {strides = array<i32>} : memref<16x128xf32, #tpu.memory_space<vmem>>, vector<16x128xf32>,
    return
  }
  func.func @transform_0(%arg0: i32) -> (i32, i32, i32) {
    %c0_i32 = arith.constant 0 : i32
    %c0_i32_0 = arith.constant 0 : i32
    %c0_i32_1 = arith.constant 0 : i32
    return %c0_i32, %arg0, %c0_i32_0 : i32, i32, i32
  }
  func.func @transform_1(%arg0: i32) -> (i32, i32) {
    %c0_i32 = arith.constant 0 : i32
    %c0_i32_0 = arith.constant 0 : i32
    %c0_i32_1 = arith.constant 0 : i32
    return %c0_i32, %c0_i32_0 : i32, i32
  }
  func.func @transform_2(%arg0: i32) -> (i32, i32) {
    %c0_i32 = arith.constant 0 : i32
    %c0_i32_0 = arith.constant 0 : i32
    %c0_i32_1 = arith.constant 0 : i32
    return %c0_i32, %c0_i32_0 : i32, i32
  }
  func.func @transform_3(%arg0: i32) -> (i32, i32) {
    %c0_i32 = arith.constant 0 : i32
    %c0_i32_0 = arith.constant 0 : i32
    %c0_i32_1 = arith.constant 0 : i32
    return %c0_i32, %c0_i32_0 : i32, i32
  }
  func.func @transform_4(%arg0: i32) -> (i32, i32) {
    %c0_i32 = arith.constant 0 : i32
    %c0_i32_0 = arith.constant 0 : i32
    %c0_i32_1 = arith.constant 0 : i32
    return %c0_i32, %c0_i32_0 : i32, i32
  }
  func.func @transform_5(%arg0: i32) -> (i32, i32) {
    %c0_i32 = arith.constant 0 : i32
    %c0_i32_0 = arith.constant 0 : i32
    %c0_i32_1 = arith.constant 0 : i32
    return %c0_i32, %c0_i32_0 : i32, i32
  }
  func.func @transform_6(%arg0: i32) -> (i32, i32) {
    %c0_i32 = arith.constant 0 : i32
    %c0_i32_0 = arith.constant 0 : i32
    %c0_i32_1 = arith.constant 0 : i32
    return %c0_i32, %c0_i32_0 : i32, i32
  }
  func.func @transform_7(%arg0: i32) -> (i32, i32) {
    %c0_i32 = arith.constant 0 : i32
    %c0_i32_0 = arith.constant 0 : i32
    %c0_i32_1 = arith.constant 0 : i32
    return %c0_i32, %c0_i32_0 : i32, i32
  }
  func.func @transform_8(%arg0: i32) -> (i32, i32) {
    %c0_i32 = arith.constant 0 : i32
    %c0_i32_0 = arith.constant 0 : i32
    %c0_i32_1 = arith.constant 0 : i32
    return %c0_i32, %c0_i32_0 : i32, i32
  }
  func.func @transform_9(%arg0: i32) -> (i32, i32) {
    %c0_i32 = arith.constant 0 : i32
    %c0_i32_0 = arith.constant 0 : i32
    %c0_i32_1 = arith.constant 0 : i32
    return %c0_i32, %c0_i32_0 : i32, i32
  }
  func.func @transform_10(%arg0: i32) -> (i32, i32) {
    %c0_i32 = arith.constant 0 : i32
    %c0_i32_0 = arith.constant 0 : i32
    %c0_i32_1 = arith.constant 0 : i32
    return %c0_i32, %c0_i32_0 : i32, i32
  }
  func.func @transform_11(%arg0: i32) -> (i32, i32) {
    %c0_i32 = arith.constant 0 : i32
    %c0_i32_0 = arith.constant 0 : i32
    %c0_i32_1 = arith.constant 0 : i32
    return %c0_i32, %c0_i32_0 : i32, i32
  }
  func.func @transform_12(%arg0: i32) -> (i32, i32) {
    %c0_i32 = arith.constant 0 : i32
    %c0_i32_0 = arith.constant 0 : i32
    %c0_i32_1 = arith.constant 0 : i32
    return %c0_i32, %c0_i32_0 : i32, i32
  }
  func.func @transform_13(%arg0: i32) -> (i32, i32) {
    %c0_i32 = arith.constant 0 : i32
    %c0_i32_0 = arith.constant 0 : i32
    return %arg0, %c0_i32 : i32, i32
  }
}

</mosaic_0001>

<llo_original>
// kernel: lenet5_forward.1
$region0: #{lenet5_forward.1}
  #allocation0 [shape = 'u32[]', space=smem, size = 0x4, offset = 0x4, fixed_abs, tag = 'smem constant byte address 0x4 - core index']
  #allocation1 [shape = 'u32[144,128]{1,0:T(1,128)}', space=vmem, size = 0x12000, scoped, tag = 'internal scratch']
  %s0 = inlined_call_operand.vmem [shape: bf16[32,16,32], index: 0, kind: input, shape index: {}]
  %s1 = inlined_call_operand.vmem [shape: bf16[160,168], index: 1, kind: input, shape index: {}]
  %s2 = inlined_call_operand.vmem [shape: f32[1,168], index: 2, kind: input, shape index: {}]
  %s3 = inlined_call_operand.vmem [shape: bf16[168,84], index: 3, kind: input, shape index: {}]
  %s4 = inlined_call_operand.vmem [shape: bf16[420,160], index: 4, kind: input, shape index: {}]
  %s5 = inlined_call_operand.vmem [shape: f32[1,160], index: 5, kind: input, shape index: {}]
  %s6 = inlined_call_operand.vmem [shape: bf16[160,80], index: 6, kind: input, shape index: {}]
  %s7 = inlined_call_operand.vmem [shape: bf16[400,120], index: 7, kind: input, shape index: {}]
  %s8 = inlined_call_operand.vmem [shape: f32[1,120], index: 8, kind: input, shape index: {}]
  %s9 = inlined_call_operand.vmem [shape: bf16[120,84], index: 9, kind: input, shape index: {}]
  %s10 = inlined_call_operand.vmem [shape: f32[1,84], index: 10, kind: input, shape index: {}]
  %s11 = inlined_call_operand.vmem [shape: bf16[84,128], index: 11, kind: input, shape index: {}]
  %s12 = inlined_call_operand.vmem [shape: f32[1,128], index: 12, kind: input, shape index: {}]
  %s13 = inlined_call_operand.vmem [shape: f32[16,128], index: 13, kind: output, shape index: {}]
  %s14 = sld [smem:[#allocation0]]
  $region62: #{lenet5_forward.1} parent=0
    _
  %s16 = ssub.s32 1, %s14
  %s17 = scalar_select 0, %s16, %s14
  // Predicated region
  $region2: #{lenet5_forward.1} parent=0 // pred_check
    _
  $region3: #{lenet5_forward.1} parent=0 // pred_check_branch
    %19 = sbr.rel (0) target = $region5
  $region4: #{lenet5_forward.1} parent=0 // pred_region
    _
  $region5: #{lenet5_forward.1} parent=0 // pred_fallthru
    _
  // Predicated region
  $region6: #{lenet5_forward.1} parent=0 // pred_check
    _
  $region7: #{lenet5_forward.1} parent=0 // pred_check_branch
    %21 = sbr.rel (0) target = $region9
  $region8: #{lenet5_forward.1} parent=0 // pred_region
    _
  $region9: #{lenet5_forward.1} parent=0 // pred_fallthru
    _
  // Predicated region
  $region10: #{lenet5_forward.1} parent=0 // pred_check
    _
  $region11: #{lenet5_forward.1} parent=0 // pred_check_branch
    %23 = sbr.rel (0) target = $region13
  $region12: #{lenet5_forward.1} parent=0 // pred_region
    _
  $region13: #{lenet5_forward.1} parent=0 // pred_fallthru
    _
  // Predicated region
  $region14: #{lenet5_forward.1} parent=0 // pred_check
    _
  $region15: #{lenet5_forward.1} parent=0 // pred_check_branch
    %25 = sbr.rel (0) target = $region17
  $region16: #{lenet5_forward.1} parent=0 // pred_region
    _
  $region17: #{lenet5_forward.1} parent=0 // pred_fallthru
    _
  // Predicated region
  $region18: #{lenet5_forward.1} parent=0 // pred_check
    _
  $region19: #{lenet5_forward.1} parent=0 // pred_check_branch
    %27 = sbr.rel (0) target = $region21
  $region20: #{lenet5_forward.1} parent=0 // pred_region
    _
  $region21: #{lenet5_forward.1} parent=0 // pred_fallthru
    _
  // Predicated region
  $region22: #{lenet5_forward.1} parent=0 // pred_check
    _
  $region23: #{lenet5_forward.1} parent=0 // pred_check_branch
    %29 = sbr.rel (0) target = $region25
  $region24: #{lenet5_forward.1} parent=0 // pred_region
    _
  $region25: #{lenet5_forward.1} parent=0 // pred_fallthru
    _
  // Predicated region
  $region26: #{lenet5_forward.1} parent=0 // pred_check
    _
  $region27: #{lenet5_forward.1} parent=0 // pred_check_branch
    %31 = sbr.rel (0) target = $region29
  $region28: #{lenet5_forward.1} parent=0 // pred_region
    _
  $region29: #{lenet5_forward.1} parent=0 // pred_fallthru
    _
  // Predicated region
  $region30: #{lenet5_forward.1} parent=0 // pred_check
    _
  $region31: #{lenet5_forward.1} parent=0 // pred_check_branch
    %33 = sbr.rel (0) target = $region33
  $region32: #{lenet5_forward.1} parent=0 // pred_region
    _
  $region33: #{lenet5_forward.1} parent=0 // pred_fallthru
    _
  // Predicated region
  $region34: #{lenet5_forward.1} parent=0 // pred_check
    _
  $region35: #{lenet5_forward.1} parent=0 // pred_check_branch
    %35 = sbr.rel (0) target = $region37
  $region36: #{lenet5_forward.1} parent=0 // pred_region
    _
  $region37: #{lenet5_forward.1} parent=0 // pred_fallthru
    _
  // Predicated region
  $region38: #{lenet5_forward.1} parent=0 // pred_check
    _
  $region39: #{lenet5_forward.1} parent=0 // pred_check_branch
    %37 = sbr.rel (0) target = $region41
  $region40: #{lenet5_forward.1} parent=0 // pred_region
    _
  $region41: #{lenet5_forward.1} parent=0 // pred_fallthru
    _
  // Predicated region
  $region42: #{lenet5_forward.1} parent=0 // pred_check
    _
  $region43: #{lenet5_forward.1} parent=0 // pred_check_branch
    %39 = sbr.rel (0) target = $region45
  $region44: #{lenet5_forward.1} parent=0 // pred_region
    _
  $region45: #{lenet5_forward.1} parent=0 // pred_fallthru
    _
  // Predicated region
  $region46: #{lenet5_forward.1} parent=0 // pred_check
    _
  $region47: #{lenet5_forward.1} parent=0 // pred_check_branch
    %41 = sbr.rel (0) target = $region49
  $region48: #{lenet5_forward.1} parent=0 // pred_region
    _
  $region49: #{lenet5_forward.1} parent=0 // pred_fallthru
    _
  // Predicated region
  $region50: #{lenet5_forward.1} parent=0 // pred_check
    _
  $region51: #{lenet5_forward.1} parent=0 // pred_check_branch
    %43 = sbr.rel (0) target = $region53
  $region52: #{lenet5_forward.1} parent=0 // pred_region
    _
  $region53: #{lenet5_forward.1} parent=0 // pred_fallthru
    _
  %v45 = vld [vmem:[%s0] sm:$0xf]
  %v46 = vld [vmem:[%s0 + $0x4] sm:$0xf]
  %v47 = vld [vmem:[%s0 + $0x8] sm:$0xf]
  %v48 = vld [vmem:[%s0 + $0xc] sm:$0xf]
  %v49 = vld [vmem:[%s0 + $0x10] sm:$0xf]
  %v50 = vld [vmem:[%s0 + $0x14] sm:$0xf]
  %v51 = vld [vmem:[%s0 + $0x18] sm:$0xf]
  %v52 = vld [vmem:[%s0 + $0x1c] sm:$0xf]
  %v53 = vld [vmem:[%s0 + $0x20] sm:$0xf]
  %v54 = vld [vmem:[%s0 + $0x24] sm:$0xf]
  %v55 = vld [vmem:[%s0 + $0x28] sm:$0xf]
  %v56 = vld [vmem:[%s0 + $0x2c] sm:$0xf]
  %v57 = vld [vmem:[%s0 + $0x30] sm:$0xf]
  %v58 = vld [vmem:[%s0 + $0x34] sm:$0xf]
  %v59 = vld [vmem:[%s0 + $0x38] sm:$0xf]
  %v60 = vld [vmem:[%s0 + $0x3c] sm:$0xf]
  %v61 = vld [vmem:[%s0 + $0x40] sm:$0xf]
  %v62 = vld [vmem:[%s0 + $0x44] sm:$0xf]
  %v63 = vld [vmem:[%s0 + $0x48] sm:$0xf]
  %v64 = vld [vmem:[%s0 + $0x4c] sm:$0xf]
  %v65 = vld [vmem:[%s0 + $0x50] sm:$0xf]
  %v66 = vld [vmem:[%s0 + $0x54] sm:$0xf]
  %v67 = vld [vmem:[%s0 + $0x58] sm:$0xf]
  %v68 = vld [vmem:[%s0 + $0x5c] sm:$0xf]
  %v69 = vld [vmem:[%s0 + $0x60] sm:$0xf]
  %v70 = vld [vmem:[%s0 + $0x64] sm:$0xf]
  %v71 = vld [vmem:[%s0 + $0x68] sm:$0xf]
  %v72 = vld [vmem:[%s0 + $0x6c] sm:$0xf]
  %v73 = vld [vmem:[%s0 + $0x70] sm:$0xf]
  %v74 = vld [vmem:[%s0 + $0x74] sm:$0xf]
  %v75 = vld [vmem:[%s0 + $0x78] sm:$0xf]
  %v76 = vld [vmem:[%s0 + $0x7c] sm:$0xf]
  %v77 = vld [vmem:[%s0 + $0x80] sm:$0xf]
  %v78 = vld [vmem:[%s0 + $0x84] sm:$0xf]
  %v79 = vld [vmem:[%s0 + $0x88] sm:$0xf]
  %v80 = vld [vmem:[%s0 + $0x8c] sm:$0xf]
  %v81 = vld [vmem:[%s0 + $0x90] sm:$0xf]
  %v82 = vld [vmem:[%s0 + $0x94] sm:$0xf]
  %v83 = vld [vmem:[%s0 + $0x98] sm:$0xf]
  %v84 = vld [vmem:[%s0 + $0x9c] sm:$0xf]
  %v85 = vld [vmem:[%s0 + $0xa0] sm:$0xf]
  %v86 = vld [vmem:[%s0 + $0xa4] sm:$0xf]
  %v87 = vld [vmem:[%s0 + $0xa8] sm:$0xf]
  %v88 = vld [vmem:[%s0 + $0xac] sm:$0xf]
  %v89 = vld [vmem:[%s0 + $0xb0] sm:$0xf]
  %v90 = vld [vmem:[%s0 + $0xb4] sm:$0xf]
  %v91 = vld [vmem:[%s0 + $0xb8] sm:$0xf]
  %v92 = vld [vmem:[%s0 + $0xbc] sm:$0xf]
  %v93 = vld [vmem:[%s0 + $0xc0] sm:$0xf]
  %v94 = vld [vmem:[%s0 + $0xc4] sm:$0xf]
  %v95 = vld [vmem:[%s0 + $0xc8] sm:$0xf]
  %v96 = vld [vmem:[%s0 + $0xcc] sm:$0xf]
  %v97 = vld [vmem:[%s0 + $0xd0] sm:$0xf]
  %v98 = vld [vmem:[%s0 + $0xd4] sm:$0xf]
  %v99 = vld [vmem:[%s0 + $0xd8] sm:$0xf]
  %v100 = vld [vmem:[%s0 + $0xdc] sm:$0xf]
  %v101 = vld [vmem:[%s0 + $0xe0] sm:$0xf]
  %v102 = vld [vmem:[%s0 + $0xe4] sm:$0xf]
  %v103 = vld [vmem:[%s0 + $0xe8] sm:$0xf]
  %v104 = vld [vmem:[%s0 + $0xec] sm:$0xf]
  %v105 = vld [vmem:[%s0 + $0xf0] sm:$0xf]
  %v106 = vld [vmem:[%s0 + $0xf4] sm:$0xf]
  %v107 = vld [vmem:[%s0 + $0xf8] sm:$0xf]
  %v108 = vld [vmem:[%s0 + $0xfc] sm:$0xf]
  %v165 = vunpack.c.l.b16 %v45
  %v166 = vunpack.c.l.b16 %v46
  %v167 = vunpack.c.l.b16 %v47
  %v168 = vunpack.c.l.b16 %v48
  %v169 = vunpack.c.l.b16 %v49
  %v170 = vunpack.c.l.b16 %v50
  %v171 = vunpack.c.l.b16 %v51
  %v172 = vunpack.c.l.b16 %v52
  %v173 = vunpack.c.l.b16 %v53
  %v174 = vunpack.c.l.b16 %v54
  %v175 = vunpack.c.l.b16 %v55
  %v176 = vunpack.c.l.b16 %v56
  %v177 = vunpack.c.l.b16 %v57
  %v178 = vunpack.c.l.b16 %v58
  %v179 = vunpack.c.l.b16 %v59
  %v180 = vunpack.c.l.b16 %v60
  %v181 = vunpack.c.l.b16 %v61
  %v182 = vunpack.c.l.b16 %v62
  %v183 = vunpack.c.l.b16 %v63
  %v184 = vunpack.c.l.b16 %v64
  %v185 = vunpack.c.l.b16 %v65
  %v186 = vunpack.c.l.b16 %v66
  %v187 = vunpack.c.l.b16 %v67
  %v188 = vunpack.c.l.b16 %v68
  %v189 = vunpack.c.l.b16 %v69
  %v190 = vunpack.c.l.b16 %v70
  %v191 = vunpack.c.l.b16 %v71
  %v192 = vunpack.c.l.b16 %v72
  %v193 = vunpack.c.l.b16 %v73
  %v194 = vunpack.c.l.b16 %v74
  %v195 = vunpack.c.l.b16 %v75
  %v196 = vunpack.c.l.b16 %v76
  %v197 = vunpack.c.l.b16 %v77
  %v198 = vunpack.c.l.b16 %v78
  %v199 = vunpack.c.l.b16 %v79
  %v200 = vunpack.c.l.b16 %v80
  %v201 = vunpack.c.l.b16 %v81
  %v202 = vunpack.c.l.b16 %v82
  %v203 = vunpack.c.l.b16 %v83
  %v204 = vunpack.c.l.b16 %v84
  %v205 = vunpack.c.l.b16 %v85
  %v206 = vunpack.c.l.b16 %v86
  %v207 = vunpack.c.l.b16 %v87
  %v208 = vunpack.c.l.b16 %v88
  %v209 = vunpack.c.l.b16 %v89
  %v210 = vunpack.c.l.b16 %v90
  %v211 = vunpack.c.l.b16 %v91
  %v212 = vunpack.c.l.b16 %v92
  %v213 = vunpack.c.l.b16 %v93
  %v214 = vunpack.c.l.b16 %v94
  %v215 = vunpack.c.l.b16 %v95
  %v216 = vunpack.c.l.b16 %v96
  %v217 = vunpack.c.l.b16 %v97
  %v218 = vunpack.c.l.b16 %v98
  %v219 = vunpack.c.l.b16 %v99
  %v220 = vunpack.c.l.b16 %v100
  %v221 = vpack.c.b16 %v166, %v165
  %v222 = vpack.c.b16 %v168, %v167
  %v223 = vpack.c.b16 %v170, %v169
  %v224 = vpack.c.b16 %v172, %v171
  %v225 = vpack.c.b16 %v174, %v173
  %v226 = vpack.c.b16 %v176, %v175
  %v227 = vpack.c.b16 %v178, %v177
  %v228 = vpack.c.b16 %v180, %v179
  %v229 = vpack.c.b16 %v182, %v181
  %v230 = vpack.c.b16 %v184, %v183
  %v231 = vpack.c.b16 %v186, %v185
  %v232 = vpack.c.b16 %v188, %v187
  %v233 = vpack.c.b16 %v190, %v189
  %v234 = vpack.c.b16 %v192, %v191
  %v235 = vpack.c.b16 %v194, %v193
  %v236 = vpack.c.b16 %v196, %v195
  %v237 = vpack.c.b16 %v198, %v197
  %v238 = vpack.c.b16 %v200, %v199
  %v239 = vpack.c.b16 %v202, %v201
  %v240 = vpack.c.b16 %v204, %v203
  %v241 = vpack.c.b16 %v206, %v205
  %v242 = vpack.c.b16 %v208, %v207
  %v243 = vpack.c.b16 %v210, %v209
  %v244 = vpack.c.b16 %v212, %v211
  %v245 = vpack.c.b16 %v214, %v213
  %v246 = vpack.c.b16 %v216, %v215
  %v247 = vpack.c.b16 %v218, %v217
  %v248 = vpack.c.b16 %v220, %v219
  %v251 = vunpack.c.l.b16 %v101
  %v252 = vunpack.c.l.b16 %v102
  %v253 = vpack.c.b16 %v252, %v251
  %254 = vrot.lane.b32.xlu0 %v222, 32
  %v255 = vpop.permute.xlu0 %254
  %256 = vrot.lane.b32.xlu0 %v223, 32
  %v257 = vpop.permute.xlu0 %256
  %258 = vrot.lane.b32.xlu0 %v224, 32
  %v259 = vpop.permute.xlu0 %258
  %260 = vrot.lane.b32.xlu0 %v225, 32
  %v261 = vpop.permute.xlu0 %260
  %262 = vrot.lane.b32.xlu0 %v226, 32
  %v263 = vpop.permute.xlu0 %262
  %264 = vrot.lane.b32.xlu0 %v227, 32
  %v265 = vpop.permute.xlu0 %264
  %266 = vrot.lane.b32.xlu0 %v228, 32
  %v267 = vpop.permute.xlu0 %266
  %268 = vrot.lane.b32.xlu0 %v229, 32
  %v269 = vpop.permute.xlu0 %268
  %270 = vrot.lane.b32.xlu0 %v230, 32
  %v271 = vpop.permute.xlu0 %270
  %272 = vrot.lane.b32.xlu0 %v231, 32
  %v273 = vpop.permute.xlu0 %272
  %274 = vrot.lane.b32.xlu0 %v232, 32
  %v275 = vpop.permute.xlu0 %274
  %276 = vrot.lane.b32.xlu0 %v233, 32
  %v277 = vpop.permute.xlu0 %276
  %278 = vrot.lane.b32.xlu0 %v234, 32
  %v279 = vpop.permute.xlu0 %278
  %280 = vrot.lane.b32.xlu0 %v235, 32
  %v281 = vpop.permute.xlu0 %280
  %282 = vrot.lane.b32.xlu0 %v236, 32
  %v283 = vpop.permute.xlu0 %282
  %284 = vrot.lane.b32.xlu0 %v237, 32
  %v285 = vpop.permute.xlu0 %284
  %286 = vrot.lane.b32.xlu0 %v238, 32
  %v287 = vpop.permute.xlu0 %286
  %288 = vrot.lane.b32.xlu0 %v239, 32
  %v289 = vpop.permute.xlu0 %288
  %290 = vrot.lane.b32.xlu0 %v240, 32
  %v291 = vpop.permute.xlu0 %290
  %292 = vrot.lane.b32.xlu0 %v241, 32
  %v293 = vpop.permute.xlu0 %292
  %294 = vrot.lane.b32.xlu0 %v242, 32
  %v295 = vpop.permute.xlu0 %294
  %296 = vrot.lane.b32.xlu0 %v243, 32
  %v297 = vpop.permute.xlu0 %296
  %298 = vrot.lane.b32.xlu0 %v244, 32
  %v299 = vpop.permute.xlu0 %298
  %300 = vrot.lane.b32.xlu0 %v245, 32
  %v301 = vpop.permute.xlu0 %300
  %302 = vrot.lane.b32.xlu0 %v246, 32
  %v303 = vpop.permute.xlu0 %302
  %304 = vrot.lane.b32.xlu0 %v247, 32
  %v305 = vpop.permute.xlu0 %304
  %306 = vrot.lane.b32.xlu0 %v248, 32
  %v307 = vpop.permute.xlu0 %306
  %308 = vrot.lane.b32.xlu0 %v253, 32
  %v309 = vpop.permute.xlu0 %308
  %v312 = vunpack.c.l.b16 %v103
  %v313 = vunpack.c.l.b16 %v104
  %v314 = vpack.c.b16 %v313, %v312
  %315 = vrot.lane.b32.xlu0 %v223, 64
  %v316 = vpop.permute.xlu0 %315
  %317 = vrot.lane.b32.xlu0 %v224, 64
  %v318 = vpop.permute.xlu0 %317
  %319 = vrot.lane.b32.xlu0 %v225, 64
  %v320 = vpop.permute.xlu0 %319
  %321 = vrot.lane.b32.xlu0 %v226, 64
  %v322 = vpop.permute.xlu0 %321
  %323 = vrot.lane.b32.xlu0 %v227, 64
  %v324 = vpop.permute.xlu0 %323
  %325 = vrot.lane.b32.xlu0 %v228, 64
  %v326 = vpop.permute.xlu0 %325
  %327 = vrot.lane.b32.xlu0 %v229, 64
  %v328 = vpop.permute.xlu0 %327
  %329 = vrot.lane.b32.xlu0 %v230, 64
  %v330 = vpop.permute.xlu0 %329
  %331 = vrot.lane.b32.xlu0 %v231, 64
  %v332 = vpop.permute.xlu0 %331
  %333 = vrot.lane.b32.xlu0 %v232, 64
  %v334 = vpop.permute.xlu0 %333
  %335 = vrot.lane.b32.xlu0 %v233, 64
  %v336 = vpop.permute.xlu0 %335
  %337 = vrot.lane.b32.xlu0 %v234, 64
  %v338 = vpop.permute.xlu0 %337
  %339 = vrot.lane.b32.xlu0 %v235, 64
  %v340 = vpop.permute.xlu0 %339
  %341 = vrot.lane.b32.xlu0 %v236, 64
  %v342 = vpop.permute.xlu0 %341
  %343 = vrot.lane.b32.xlu0 %v237, 64
  %v344 = vpop.permute.xlu0 %343
  %345 = vrot.lane.b32.xlu0 %v238, 64
  %v346 = vpop.permute.xlu0 %345
  %347 = vrot.lane.b32.xlu0 %v239, 64
  %v348 = vpop.permute.xlu0 %347
  %349 = vrot.lane.b32.xlu0 %v240, 64
  %v350 = vpop.permute.xlu0 %349
  %351 = vrot.lane.b32.xlu0 %v241, 64
  %v352 = vpop.permute.xlu0 %351
  %353 = vrot.lane.b32.xlu0 %v242, 64
  %v354 = vpop.permute.xlu0 %353
  %355 = vrot.lane.b32.xlu0 %v243, 64
  %v356 = vpop.permute.xlu0 %355
  %357 = vrot.lane.b32.xlu0 %v244, 64
  %v358 = vpop.permute.xlu0 %357
  %359 = vrot.lane.b32.xlu0 %v245, 64
  %v360 = vpop.permute.xlu0 %359
  %361 = vrot.lane.b32.xlu0 %v246, 64
  %v362 = vpop.permute.xlu0 %361
  %363 = vrot.lane.b32.xlu0 %v247, 64
  %v364 = vpop.permute.xlu0 %363
  %365 = vrot.lane.b32.xlu0 %v248, 64
  %v366 = vpop.permute.xlu0 %365
  %367 = vrot.lane.b32.xlu0 %v253, 64
  %v368 = vpop.permute.xlu0 %367
  %369 = vrot.lane.b32.xlu0 %v314, 64
  %v370 = vpop.permute.xlu0 %369
  %v373 = vunpack.c.l.b16 %v105
  %v374 = vunpack.c.l.b16 %v106
  %v375 = vpack.c.b16 %v374, %v373
  %376 = vrot.lane.b32.xlu0 %v224, 96
  %v377 = vpop.permute.xlu0 %376
  %378 = vrot.lane.b32.xlu0 %v225, 96
  %v379 = vpop.permute.xlu0 %378
  %380 = vrot.lane.b32.xlu0 %v226, 96
  %v381 = vpop.permute.xlu0 %380
  %382 = vrot.lane.b32.xlu0 %v227, 96
  %v383 = vpop.permute.xlu0 %382
  %384 = vrot.lane.b32.xlu0 %v228, 96
  %v385 = vpop.permute.xlu0 %384
  %386 = vrot.lane.b32.xlu0 %v229, 96
  %v387 = vpop.permute.xlu0 %386
  %388 = vrot.lane.b32.xlu0 %v230, 96
  %v389 = vpop.permute.xlu0 %388
  %390 = vrot.lane.b32.xlu0 %v231, 96
  %v391 = vpop.permute.xlu0 %390
  %392 = vrot.lane.b32.xlu0 %v232, 96
  %v393 = vpop.permute.xlu0 %392
  %394 = vrot.lane.b32.xlu0 %v233, 96
  %v395 = vpop.permute.xlu0 %394
  %396 = vrot.lane.b32.xlu0 %v234, 96
  %v397 = vpop.permute.xlu0 %396
  %398 = vrot.lane.b32.xlu0 %v235, 96
  %v399 = vpop.permute.xlu0 %398
  %400 = vrot.lane.b32.xlu0 %v236, 96
  %v401 = vpop.permute.xlu0 %400
  %402 = vrot.lane.b32.xlu0 %v237, 96
  %v403 = vpop.permute.xlu0 %402
  %404 = vrot.lane.b32.xlu0 %v238, 96
  %v405 = vpop.permute.xlu0 %404
  %406 = vrot.lane.b32.xlu0 %v239, 96
  %v407 = vpop.permute.xlu0 %406
  %408 = vrot.lane.b32.xlu0 %v240, 96
  %v409 = vpop.permute.xlu0 %408
  %410 = vrot.lane.b32.xlu0 %v241, 96
  %v411 = vpop.permute.xlu0 %410
  %412 = vrot.lane.b32.xlu0 %v242, 96
  %v413 = vpop.permute.xlu0 %412
  %414 = vrot.lane.b32.xlu0 %v243, 96
  %v415 = vpop.permute.xlu0 %414
  %416 = vrot.lane.b32.xlu0 %v244, 96
  %v417 = vpop.permute.xlu0 %416
  %418 = vrot.lane.b32.xlu0 %v245, 96
  %v419 = vpop.permute.xlu0 %418
  %420 = vrot.lane.b32.xlu0 %v246, 96
  %v421 = vpop.permute.xlu0 %420
  %422 = vrot.lane.b32.xlu0 %v247, 96
  %v423 = vpop.permute.xlu0 %422
  %424 = vrot.lane.b32.xlu0 %v248, 96
  %v425 = vpop.permute.xlu0 %424
  %426 = vrot.lane.b32.xlu0 %v253, 96
  %v427 = vpop.permute.xlu0 %426
  %428 = vrot.lane.b32.xlu0 %v314, 96
  %v429 = vpop.permute.xlu0 %428
  %430 = vrot.lane.b32.xlu0 %v375, 96
  %v431 = vpop.permute.xlu0 %430
  %v434 = vunpack.c.l.b16 %v107
  %v435 = vunpack.c.l.b16 %v108
  %v436 = vpack.c.b16 %v435, %v434
  %vm437 = vcmask 261120
  %v440 = vsel %vm437, %v221, %v255
  %v443 = vsel %vm437, %v222, %v257
  %v446 = vsel %vm437, %v223, %v259
  %v449 = vsel %vm437, %v224, %v261
  %v452 = vsel %vm437, %v225, %v263
  %v455 = vsel %vm437, %v226, %v265
  %v458 = vsel %vm437, %v227, %v267
  %v461 = vsel %vm437, %v228, %v269
  %v464 = vsel %vm437, %v229, %v271
  %v467 = vsel %vm437, %v230, %v273
  %v470 = vsel %vm437, %v231, %v275
  %v473 = vsel %vm437, %v232, %v277
  %v476 = vsel %vm437, %v233, %v279
  %v479 = vsel %vm437, %v234, %v281
  %v482 = vsel %vm437, %v235, %v283
  %v485 = vsel %vm437, %v236, %v285
  %v488 = vsel %vm437, %v237, %v287
  %v491 = vsel %vm437, %v238, %v289
  %v494 = vsel %vm437, %v239, %v291
  %v497 = vsel %vm437, %v240, %v293
  %v500 = vsel %vm437, %v241, %v295
  %v503 = vsel %vm437, %v242, %v297
  %v506 = vsel %vm437, %v243, %v299
  %v509 = vsel %vm437, %v244, %v301
  %v512 = vsel %vm437, %v245, %v303
  %v515 = vsel %vm437, %v246, %v305
  %v518 = vsel %vm437, %v247, %v307
  %v521 = vsel %vm437, %v248, %v309
  %vm522 = vcmask 523264
  %v524 = vsel %vm522, %v440, %v316
  %v526 = vsel %vm522, %v443, %v318
  %v528 = vsel %vm522, %v446, %v320
  %v530 = vsel %vm522, %v449, %v322
  %v532 = vsel %vm522, %v452, %v324
  %v534 = vsel %vm522, %v455, %v326
  %v536 = vsel %vm522, %v458, %v328
  %v538 = vsel %vm522, %v461, %v330
  %v540 = vsel %vm522, %v464, %v332
  %v542 = vsel %vm522, %v467, %v334
  %v544 = vsel %vm522, %v470, %v336
  %v546 = vsel %vm522, %v473, %v338
  %v548 = vsel %vm522, %v476, %v340
  %v550 = vsel %vm522, %v479, %v342
  %v552 = vsel %vm522, %v482, %v344
  %v554 = vsel %vm522, %v485, %v346
  %v556 = vsel %vm522, %v488, %v348
  %v558 = vsel %vm522, %v491, %v350
  %v560 = vsel %vm522, %v494, %v352
  %v562 = vsel %vm522, %v497, %v354
  %v564 = vsel %vm522, %v500, %v356
  %v566 = vsel %vm522, %v503, %v358
  %v568 = vsel %vm522, %v506, %v360
  %v570 = vsel %vm522, %v509, %v362
  %v572 = vsel %vm522, %v512, %v364
  %v574 = vsel %vm522, %v515, %v366
  %v576 = vsel %vm522, %v518, %v368
  %v578 = vsel %vm522, %v521, %v370
  %vm579 = vcmask 785408
  %v581 = vsel %vm579, %v524, %v377
  %v584 = vsel %vm579, %v526, %v379
  %v587 = vsel %vm579, %v528, %v381
  %v590 = vsel %vm579, %v530, %v383
  %v593 = vsel %vm579, %v532, %v385
  %v596 = vsel %vm579, %v534, %v387
  %v599 = vsel %vm579, %v536, %v389
  %v602 = vsel %vm579, %v538, %v391
  %v605 = vsel %vm579, %v540, %v393
  %v608 = vsel %vm579, %v542, %v395
  %v611 = vsel %vm579, %v544, %v397
  %v614 = vsel %vm579, %v546, %v399
  %v617 = vsel %vm579, %v548, %v401
  %v620 = vsel %vm579, %v550, %v403
  %v623 = vsel %vm579, %v552, %v405
  %v626 = vsel %vm579, %v554, %v407
  %v629 = vsel %vm579, %v556, %v409
  %v632 = vsel %vm579, %v558, %v411
  %v635 = vsel %vm579, %v560, %v413
  %v638 = vsel %vm579, %v562, %v415
  %v641 = vsel %vm579, %v564, %v417
  %v644 = vsel %vm579, %v566, %v419
  %v647 = vsel %vm579, %v568, %v421
  %v650 = vsel %vm579, %v570, %v423
  %v653 = vsel %vm579, %v572, %v425
  %v656 = vsel %vm579, %v574, %v427
  %v659 = vsel %vm579, %v576, %v429
  %v662 = vsel %vm579, %v578, %v431
  %v664 = vld [vmem:[%s1] sm:$0xff]
  %v665 = vld [vmem:[%s1 + $0x8] sm:$0xff]
  %v666 = vld [vmem:[%s1 + $0x10] sm:$0xff]
  %v667 = vld [vmem:[%s1 + $0x18] sm:$0xff]
  %v668 = vld [vmem:[%s1 + $0x20] sm:$0xff]
  %v669 = vld [vmem:[%s1 + $0x28] sm:$0xff]
  %v670 = vld [vmem:[%s1 + $0x30] sm:$0xff]
  %v671 = vld [vmem:[%s1 + $0x38] sm:$0xff]
  %v672 = vld [vmem:[%s1 + $0x40] sm:$0xff]
  %v673 = vld [vmem:[%s1 + $0x48] sm:$0xff]
  %v674 = vld [vmem:[%s1 + $0x50] sm:$0xff]
  %v675 = vld [vmem:[%s1 + $0x58] sm:$0xff]
  %v676 = vld [vmem:[%s1 + $0x60] sm:$0xff]
  %v677 = vld [vmem:[%s1 + $0x68] sm:$0xff]
  %v678 = vld [vmem:[%s1 + $0x70] sm:$0xff]
  %v679 = vld [vmem:[%s1 + $0x78] sm:$0xff]
  %v680 = vld [vmem:[%s1 + $0x80] sm:$0xff]
  %v681 = vld [vmem:[%s1 + $0x88] sm:$0xff]
  %v682 = vld [vmem:[%s1 + $0x90] sm:$0xff]
  %v683 = vld [vmem:[%s1 + $0x98] sm:$0xff]
  %v684 = vld [vmem:[%s2] sm:$0x3]
  %v686 = vlaneseq
  %v687 = vshrl.u32 %v686, 7
  %v688 = vsub.s32 0, %v687
  %v689 = vrot.slane %v684, %v688
  %v690 = vlaneseq
  %v691 = vshrl.u32 %v690, 7
  %v692 = vsub.s32 1, %v691
  %v693 = vrot.slane %v684, %v692
  %v716 = vunpack.c.l.b16 %v664
  %v717 = vunpack.c.h.b16 %v664
  %v718 = vunpack.c.l.b16 %v665
  %v719 = vunpack.c.h.b16 %v665
  %v720 = vunpack.c.l.b16 %v666
  %v721 = vunpack.c.h.b16 %v666
  %v722 = vunpack.c.l.b16 %v667
  %v723 = vunpack.c.h.b16 %v667
  %v724 = vunpack.c.l.b16 %v668
  %v725 = vunpack.c.h.b16 %v668
  %v726 = vunpack.c.l.b16 %v669
  %v727 = vunpack.c.h.b16 %v669
  %v728 = vunpack.c.l.b16 %v670
  %v729 = vunpack.c.h.b16 %v670
  %v730 = vunpack.c.l.b16 %v671
  %v731 = vunpack.c.h.b16 %v671
  %v732 = vunpack.c.l.b16 %v672
  %v733 = vunpack.c.h.b16 %v672
  %v734 = vunpack.c.l.b16 %v673
  %v735 = vunpack.c.h.b16 %v673
  %v736 = vunpack.c.l.b16 %v674
  %v737 = vunpack.c.h.b16 %v674
  %v738 = vunpack.c.l.b16 %v675
  %v739 = vunpack.c.h.b16 %v675
  %v740 = vunpack.c.l.b16 %v676
  %v741 = vunpack.c.h.b16 %v676
  %v742 = vunpack.c.l.b16 %v677
  %v743 = vunpack.c.h.b16 %v677
  %v744 = vunpack.c.l.b16 %v678
  %v745 = vunpack.c.h.b16 %v678
  %v746 = vunpack.c.l.b16 %v679
  %v747 = vunpack.c.h.b16 %v679
  %v748 = vunpack.c.l.b16 %v680
  %v749 = vunpack.c.h.b16 %v680
  %v750 = vunpack.c.l.b16 %v681
  %v751 = vunpack.c.h.b16 %v681
  %v752 = vunpack.c.l.b16 %v682
  %v753 = vunpack.c.h.b16 %v682
  %v754 = vunpack.c.l.b16 %v683
  %v755 = vunpack.c.h.b16 %v683
  %v756 = vpack.c.b16 %v718, %v716
  %v757 = vpack.c.b16 %v719, %v717
  %v758 = vpack.c.b16 %v722, %v720
  %v759 = vpack.c.b16 %v723, %v721
  %v760 = vpack.c.b16 %v726, %v724
  %v761 = vpack.c.b16 %v727, %v725
  %v762 = vpack.c.b16 %v730, %v728
  %v763 = vpack.c.b16 %v731, %v729
  %v764 = vpack.c.b16 %v734, %v732
  %v765 = vpack.c.b16 %v735, %v733
  %v766 = vpack.c.b16 %v738, %v736
  %v767 = vpack.c.b16 %v739, %v737
  %v768 = vpack.c.b16 %v742, %v740
  %v769 = vpack.c.b16 %v743, %v741
  %v770 = vpack.c.b16 %v746, %v744
  %v771 = vpack.c.b16 %v747, %v745
  %v772 = vpack.c.b16 %v750, %v748
  %v773 = vpack.c.b16 %v751, %v749
  %v774 = vpack.c.b16 %v754, %v752
  %v775 = vpack.c.b16 %v755, %v753
  %v796 = vsel %vm437, %v225, 0
  %v798 = vsel %vm437, %v226, 0
  %v800 = vsel %vm437, %v227, 0
  %v802 = vsel %vm437, %v228, 0
  %v804 = vsel %vm437, %v229, 0
  %v806 = vsel %vm437, %v230, 0
  %v808 = vsel %vm437, %v231, 0
  %v810 = vsel %vm437, %v232, 0
  %v812 = vsel %vm437, %v233, 0
  %v814 = vsel %vm437, %v234, 0
  %v816 = vsel %vm437, %v235, 0
  %v818 = vsel %vm437, %v236, 0
  %v820 = vsel %vm437, %v237, 0
  %v822 = vsel %vm437, %v238, 0
  %v824 = vsel %vm437, %v239, 0
  %v826 = vsel %vm437, %v240, 0
  %v828 = vsel %vm437, %v241, 0
  %v830 = vsel %vm437, %v242, 0
  %v832 = vsel %vm437, %v243, 0
  %v834 = vsel %vm437, %v244, 0
  %v836 = vsel %vm437, %v245, 0
  %v838 = vsel %vm437, %v246, 0
  %v840 = vsel %vm437, %v247, 0
  %v842 = vsel %vm437, %v248, 0
  %v845 = vsel %vm437, %v253, 0
  %v848 = vsel %vm437, %v314, 0
  %v851 = vsel %vm437, %v375, 0
  %v854 = vsel %vm437, %v436, 0
  %856 = vmatprep.subr.bf16.mxu0 %v757
  %857 = vmatpush1.bf16.msra.mxu0 %v756
  %858 = vmatprep.subr.bf16.mxu0 %v759
  %859 = vmatpush1.bf16.msra.mxu0 %v758
  %860 = vmatprep.subr.bf16.mxu0 %v761
  %861 = vmatpush1.bf16.msra.mxu0 %v760
  %862 = vmatprep.subr.bf16.mxu0 %v763
  %863 = vmatpush1.bf16.msra.mxu0 %v762
  %864 = vmatprep.subr.bf16.mxu0 %v765
  %865 = vmatpush1.bf16.msra.mxu0 %v764
  %866 = vmatprep.subr.bf16.mxu0 %v767
  %867 = vmatpush1.bf16.msra.mxu0 %v766
  %868 = vmatprep.subr.bf16.mxu0 %v769
  %869 = vmatpush1.bf16.msra.mxu0 %v768
  %870 = vmatprep.subr.bf16.mxu0 %v771
  %871 = vmatpush1.bf16.msra.mxu0 %v770
  %872 = vmatprep.subr.bf16.mxu0 %v773
  %873 = vmatpush1.bf16.msra.mxu0 %v772
  %874 = vmatprep.subr.bf16.mxu0 %v775
  %875 = vmatpush1.bf16.msra.mxu0 %v774
  %876 = vmatprep.subr.bf16.mxu0 0
  %877 = vmatpush1.bf16.msra.mxu0 0
  %878 = vmatprep.subr.bf16.mxu0 0
  %879 = vmatpush1.bf16.msra.mxu0 0
  %880 = vmatprep.subr.bf16.mxu0 0
  %881 = vmatpush1.bf16.msra.mxu0 0
  %882 = vmatprep.subr.bf16.mxu0 0
  %883 = vmatpush1.bf16.msra.mxu0 0
  %884 = vmatprep.subr.bf16.mxu0 0
  %885 = vmatpush1.bf16.msra.mxu0 0
  %886 = vmatprep.subr.bf16.mxu0 0
  %887 = vmatpush1.bf16.msra.mxu0 0
  %888 = vmatprep.mubr.bf16.mxu0 %v796
  %889 = vmatmul.mubr.bf16.gmra.mrb[0].mxu0 %v581
  %v890 = vpop.f32.mrb[0].mxu0
  %v891 = vadd.f32 %v689, %v890
  %v892 = vpop.f32.mrb[0].mxu0
  %v893 = vadd.f32 %v693, %v892
  %v894 = vpop.f32.mrb[0].mxu0
  %v895 = vadd.f32 %v689, %v894
  %v896 = vpop.f32.mrb[0].mxu0
  %v897 = vadd.f32 %v693, %v896
  %898 = vmatprep.mubr.bf16.mxu0 %v798
  %899 = vmatmul.mubr.bf16.gmra.mrb[0].mxu0 %v584
  %v900 = vpop.f32.mrb[0].mxu0
  %v901 = vadd.f32 %v689, %v900
  %v902 = vpop.f32.mrb[0].mxu0
  %v903 = vadd.f32 %v693, %v902
  %v904 = vpop.f32.mrb[0].mxu0
  %v905 = vadd.f32 %v689, %v904
  %v906 = vpop.f32.mrb[0].mxu0
  %v907 = vadd.f32 %v693, %v906
  %908 = vmatprep.mubr.bf16.mxu0 %v800
  %909 = vmatmul.mubr.bf16.gmra.mrb[0].mxu0 %v587
  %v910 = vpop.f32.mrb[0].mxu0
  %v911 = vadd.f32 %v689, %v910
  %v912 = vpop.f32.mrb[0].mxu0
  %v913 = vadd.f32 %v693, %v912
  %v914 = vpop.f32.mrb[0].mxu0
  %v915 = vadd.f32 %v689, %v914
  %v916 = vpop.f32.mrb[0].mxu0
  %v917 = vadd.f32 %v693, %v916
  %918 = vmatprep.mubr.bf16.mxu0 %v802
  %919 = vmatmul.mubr.bf16.gmra.mrb[0].mxu0 %v590
  %v920 = vpop.f32.mrb[0].mxu0
  %v921 = vadd.f32 %v689, %v920
  %v922 = vpop.f32.mrb[0].mxu0
  %v923 = vadd.f32 %v693, %v922
  %v924 = vpop.f32.mrb[0].mxu0
  %v925 = vadd.f32 %v689, %v924
  %v926 = vpop.f32.mrb[0].mxu0
  %v927 = vadd.f32 %v693, %v926
  %928 = vmatprep.mubr.bf16.mxu0 %v804
  %929 = vmatmul.mubr.bf16.gmra.mrb[0].mxu0 %v593
  %v930 = vpop.f32.mrb[0].mxu0
  %v931 = vadd.f32 %v689, %v930
  %v932 = vpop.f32.mrb[0].mxu0
  %v933 = vadd.f32 %v693, %v932
  %v934 = vpop.f32.mrb[0].mxu0
  %v935 = vadd.f32 %v689, %v934
  %v936 = vpop.f32.mrb[0].mxu0
  %v937 = vadd.f32 %v693, %v936
  %938 = vmatprep.mubr.bf16.mxu0 %v806
  %939 = vmatmul.mubr.bf16.gmra.mrb[0].mxu0 %v596
  %v940 = vpop.f32.mrb[0].mxu0
  %v941 = vadd.f32 %v689, %v940
  %v942 = vpop.f32.mrb[0].mxu0
  %v943 = vadd.f32 %v693, %v942
  %v944 = vpop.f32.mrb[0].mxu0
  %v945 = vadd.f32 %v689, %v944
  %v946 = vpop.f32.mrb[0].mxu0
  %v947 = vadd.f32 %v693, %v946
  %948 = vmatprep.mubr.bf16.mxu0 %v808
  %949 = vmatmul.mubr.bf16.gmra.mrb[0].mxu0 %v599
  %v950 = vpop.f32.mrb[0].mxu0
  %v951 = vadd.f32 %v689, %v950
  %v952 = vpop.f32.mrb[0].mxu0
  %v953 = vadd.f32 %v693, %v952
  %v954 = vpop.f32.mrb[0].mxu0
  %v955 = vadd.f32 %v689, %v954
  %v956 = vpop.f32.mrb[0].mxu0
  %v957 = vadd.f32 %v693, %v956
  %958 = vmatprep.mubr.bf16.mxu0 %v810
  %959 = vmatmul.mubr.bf16.gmra.mrb[0].mxu0 %v602
  %v960 = vpop.f32.mrb[0].mxu0
  %v961 = vadd.f32 %v689, %v960
  %v962 = vpop.f32.mrb[0].mxu0
  %v963 = vadd.f32 %v693, %v962
  %v964 = vpop.f32.mrb[0].mxu0
  %v965 = vadd.f32 %v689, %v964
  %v966 = vpop.f32.mrb[0].mxu0
  %v967 = vadd.f32 %v693, %v966
  %968 = vmatprep.mubr.bf16.mxu0 %v812
  %969 = vmatmul.mubr.bf16.gmra.mrb[0].mxu0 %v605
  %v970 = vpop.f32.mrb[0].mxu0
  %v971 = vadd.f32 %v689, %v970
  %v972 = vpop.f32.mrb[0].mxu0
  %v973 = vadd.f32 %v693, %v972
  %v974 = vpop.f32.mrb[0].mxu0
  %v975 = vadd.f32 %v689, %v974
  %v976 = vpop.f32.mrb[0].mxu0
  %v977 = vadd.f32 %v693, %v976
  %978 = vmatprep.mubr.bf16.mxu0 %v814
  %979 = vmatmul.mubr.bf16.gmra.mrb[0].mxu0 %v608
  %v980 = vpop.f32.mrb[0].mxu0
  %v981 = vadd.f32 %v689, %v980
  %v982 = vpop.f32.mrb[0].mxu0
  %v983 = vadd.f32 %v693, %v982
  %v984 = vpop.f32.mrb[0].mxu0
  %v985 = vadd.f32 %v689, %v984
  %v986 = vpop.f32.mrb[0].mxu0
  %v987 = vadd.f32 %v693, %v986
  %988 = vmatprep.mubr.bf16.mxu0 %v816
  %989 = vmatmul.mubr.bf16.gmra.mrb[0].mxu0 %v611
  %v990 = vpop.f32.mrb[0].mxu0
  %v991 = vadd.f32 %v689, %v990
  %v992 = vpop.f32.mrb[0].mxu0
  %v993 = vadd.f32 %v693, %v992
  %v994 = vpop.f32.mrb[0].mxu0
  %v995 = vadd.f32 %v689, %v994
  %v996 = vpop.f32.mrb[0].mxu0
  %v997 = vadd.f32 %v693, %v996
  %998 = vmatprep.mubr.bf16.mxu0 %v818
  %999 = vmatmul.mubr.bf16.gmra.mrb[0].mxu0 %v614
  %v1000 = vpop.f32.mrb[0].mxu0
  %v1001 = vadd.f32 %v689, %v1000
  %v1002 = vpop.f32.mrb[0].mxu0
  %v1003 = vadd.f32 %v693, %v1002
  %v1004 = vpop.f32.mrb[0].mxu0
  %v1005 = vadd.f32 %v689, %v1004
  %v1006 = vpop.f32.mrb[0].mxu0
  %v1007 = vadd.f32 %v693, %v1006
  %1008 = vmatprep.mubr.bf16.mxu0 %v820
  %1009 = vmatmul.mubr.bf16.gmra.mrb[0].mxu0 %v617
  %v1010 = vpop.f32.mrb[0].mxu0
  %v1011 = vadd.f32 %v689, %v1010
  %v1012 = vpop.f32.mrb[0].mxu0
  %v1013 = vadd.f32 %v693, %v1012
  %v1014 = vpop.f32.mrb[0].mxu0
  %v1015 = vadd.f32 %v689, %v1014
  %v1016 = vpop.f32.mrb[0].mxu0
  %v1017 = vadd.f32 %v693, %v1016
  %1018 = vmatprep.mubr.bf16.mxu0 %v822
  %1019 = vmatmul.mubr.bf16.gmra.mrb[0].mxu0 %v620
  %v1020 = vpop.f32.mrb[0].mxu0
  %v1021 = vadd.f32 %v689, %v1020
  %v1022 = vpop.f32.mrb[0].mxu0
  %v1023 = vadd.f32 %v693, %v1022
  %v1024 = vpop.f32.mrb[0].mxu0
  %v1025 = vadd.f32 %v689, %v1024
  %v1026 = vpop.f32.mrb[0].mxu0
  %v1027 = vadd.f32 %v693, %v1026
  %1028 = vmatprep.mubr.bf16.mxu0 %v824
  %1029 = vmatmul.mubr.bf16.gmra.mrb[0].mxu0 %v623
  %v1030 = vpop.f32.mrb[0].mxu0
  %v1031 = vadd.f32 %v689, %v1030
  %v1032 = vpop.f32.mrb[0].mxu0
  %v1033 = vadd.f32 %v693, %v1032
  %v1034 = vpop.f32.mrb[0].mxu0
  %v1035 = vadd.f32 %v689, %v1034
  %v1036 = vpop.f32.mrb[0].mxu0
  %v1037 = vadd.f32 %v693, %v1036
  %1038 = vmatprep.mubr.bf16.mxu0 %v826
  %1039 = vmatmul.mubr.bf16.gmra.mrb[0].mxu0 %v626
  %v1040 = vpop.f32.mrb[0].mxu0
  %v1041 = vadd.f32 %v689, %v1040
  %v1042 = vpop.f32.mrb[0].mxu0
  %v1043 = vadd.f32 %v693, %v1042
  %v1044 = vpop.f32.mrb[0].mxu0
  %v1045 = vadd.f32 %v689, %v1044
  %v1046 = vpop.f32.mrb[0].mxu0
  %v1047 = vadd.f32 %v693, %v1046
  %1048 = vmatprep.mubr.bf16.mxu0 %v828
  %1049 = vmatmul.mubr.bf16.gmra.mrb[0].mxu0 %v629
  %v1050 = vpop.f32.mrb[0].mxu0
  %v1051 = vadd.f32 %v689, %v1050
  %v1052 = vpop.f32.mrb[0].mxu0
  %v1053 = vadd.f32 %v693, %v1052
  %v1054 = vpop.f32.mrb[0].mxu0
  %v1055 = vadd.f32 %v689, %v1054
  %v1056 = vpop.f32.mrb[0].mxu0
  %v1057 = vadd.f32 %v693, %v1056
  %1058 = vmatprep.mubr.bf16.mxu0 %v830
  %1059 = vmatmul.mubr.bf16.gmra.mrb[0].mxu0 %v632
  %v1060 = vpop.f32.mrb[0].mxu0
  %v1061 = vadd.f32 %v689, %v1060
  %v1062 = vpop.f32.mrb[0].mxu0
  %v1063 = vadd.f32 %v693, %v1062
  %v1064 = vpop.f32.mrb[0].mxu0
  %v1065 = vadd.f32 %v689, %v1064
  %v1066 = vpop.f32.mrb[0].mxu0
  %v1067 = vadd.f32 %v693, %v1066
  %1068 = vmatprep.mubr.bf16.mxu0 %v832
  %1069 = vmatmul.mubr.bf16.gmra.mrb[0].mxu0 %v635
  %v1070 = vpop.f32.mrb[0].mxu0
  %v1071 = vadd.f32 %v689, %v1070
  %v1072 = vpop.f32.mrb[0].mxu0
  %v1073 = vadd.f32 %v693, %v1072
  %v1074 = vpop.f32.mrb[0].mxu0
  %v1075 = vadd.f32 %v689, %v1074
  %v1076 = vpop.f32.mrb[0].mxu0
  %v1077 = vadd.f32 %v693, %v1076
  %1078 = vmatprep.mubr.bf16.mxu0 %v834
  %1079 = vmatmul.mubr.bf16.gmra.mrb[0].mxu0 %v638
  %v1080 = vpop.f32.mrb[0].mxu0
  %v1081 = vadd.f32 %v689, %v1080
  %v1082 = vpop.f32.mrb[0].mxu0
  %v1083 = vadd.f32 %v693, %v1082
  %v1084 = vpop.f32.mrb[0].mxu0
  %v1085 = vadd.f32 %v689, %v1084
  %v1086 = vpop.f32.mrb[0].mxu0
  %v1087 = vadd.f32 %v693, %v1086
  %1088 = vmatprep.mubr.bf16.mxu0 %v836
  %1089 = vmatmul.mubr.bf16.gmra.mrb[0].mxu0 %v641
  %v1090 = vpop.f32.mrb[0].mxu0
  %v1091 = vadd.f32 %v689, %v1090
  %v1092 = vpop.f32.mrb[0].mxu0
  %v1093 = vadd.f32 %v693, %v1092
  %v1094 = vpop.f32.mrb[0].mxu0
  %v1095 = vadd.f32 %v689, %v1094
  %v1096 = vpop.f32.mrb[0].mxu0
  %v1097 = vadd.f32 %v693, %v1096
  %1098 = vmatprep.mubr.bf16.mxu0 %v838
  %1099 = vmatmul.mubr.bf16.gmra.mrb[0].mxu0 %v644
  %v1100 = vpop.f32.mrb[0].mxu0
  %v1101 = vadd.f32 %v689, %v1100
  %v1102 = vpop.f32.mrb[0].mxu0
  %v1103 = vadd.f32 %v693, %v1102
  %v1104 = vpop.f32.mrb[0].mxu0
  %v1105 = vadd.f32 %v689, %v1104
  %v1106 = vpop.f32.mrb[0].mxu0
  %v1107 = vadd.f32 %v693, %v1106
  %1108 = vmatprep.mubr.bf16.mxu0 %v840
  %1109 = vmatmul.mubr.bf16.gmra.mrb[0].mxu0 %v647
  %v1110 = vpop.f32.mrb[0].mxu0
  %v1111 = vadd.f32 %v689, %v1110
  %v1112 = vpop.f32.mrb[0].mxu0
  %v1113 = vadd.f32 %v693, %v1112
  %v1114 = vpop.f32.mrb[0].mxu0
  %v1115 = vadd.f32 %v689, %v1114
  %v1116 = vpop.f32.mrb[0].mxu0
  %v1117 = vadd.f32 %v693, %v1116
  %1118 = vmatprep.mubr.bf16.mxu0 %v842
  %1119 = vmatmul.mubr.bf16.gmra.mrb[0].mxu0 %v650
  %v1120 = vpop.f32.mrb[0].mxu0
  %v1121 = vadd.f32 %v689, %v1120
  %v1122 = vpop.f32.mrb[0].mxu0
  %v1123 = vadd.f32 %v693, %v1122
  %v1124 = vpop.f32.mrb[0].mxu0
  %v1125 = vadd.f32 %v689, %v1124
  %v1126 = vpop.f32.mrb[0].mxu0
  %v1127 = vadd.f32 %v693, %v1126
  %1128 = vmatprep.mubr.bf16.mxu0 %v845
  %1129 = vmatmul.mubr.bf16.gmra.mrb[0].mxu0 %v653
  %v1130 = vpop.f32.mrb[0].mxu0
  %v1131 = vadd.f32 %v689, %v1130
  %v1132 = vpop.f32.mrb[0].mxu0
  %v1133 = vadd.f32 %v693, %v1132
  %v1134 = vpop.f32.mrb[0].mxu0
  %v1135 = vadd.f32 %v689, %v1134
  %v1136 = vpop.f32.mrb[0].mxu0
  %v1137 = vadd.f32 %v693, %v1136
  %1138 = vmatprep.mubr.bf16.mxu0 %v848
  %1139 = vmatmul.mubr.bf16.gmra.mrb[0].mxu0 %v656
  %v1140 = vpop.f32.mrb[0].mxu0
  %v1141 = vadd.f32 %v689, %v1140
  %v1142 = vpop.f32.mrb[0].mxu0
  %v1143 = vadd.f32 %v693, %v1142
  %v1144 = vpop.f32.mrb[0].mxu0
  %v1145 = vadd.f32 %v689, %v1144
  %v1146 = vpop.f32.mrb[0].mxu0
  %v1147 = vadd.f32 %v693, %v1146
  %1148 = vmatprep.mubr.bf16.mxu0 %v851
  %1149 = vmatmul.mubr.bf16.gmra.mrb[0].mxu0 %v659
  %v1150 = vpop.f32.mrb[0].mxu0
  %v1151 = vadd.f32 %v689, %v1150
  %v1152 = vpop.f32.mrb[0].mxu0
  %v1153 = vadd.f32 %v693, %v1152
  %v1154 = vpop.f32.mrb[0].mxu0
  %v1155 = vadd.f32 %v689, %v1154
  %v1156 = vpop.f32.mrb[0].mxu0
  %v1157 = vadd.f32 %v693, %v1156
  %1158 = vmatprep.mubr.bf16.mxu0 %v854
  %1159 = vmatmul.mubr.bf16.gmra.mrb[0].mxu0 %v662
  %v1160 = vpop.f32.mrb[0].mxu0
  %v1161 = vadd.f32 %v689, %v1160
  %v1162 = vpop.f32.mrb[0].mxu0
  %v1163 = vadd.f32 %v693, %v1162
  %v1164 = vpop.f32.mrb[0].mxu0
  %v1165 = vadd.f32 %v689, %v1164
  %v1166 = vpop.f32.mrb[0].mxu0
  %v1167 = vadd.f32 %v693, %v1166
  %1168 = vdwg.mxu0
  %v1169 = vmax.f32 %v891, 0.0
  %v1170 = vmax.f32 %v893, 0.0
  %v1171 = vmax.f32 %v895, 0.0
  %v1172 = vmax.f32 %v897, 0.0
  %v1173 = vmax.f32 %v901, 0.0
  %v1174 = vmax.f32 %v903, 0.0
  %v1175 = vmax.f32 %v905, 0.0
  %v1176 = vmax.f32 %v907, 0.0
  %v1177 = vmax.f32 %v911, 0.0
  %v1178 = vmax.f32 %v913, 0.0
  %v1179 = vmax.f32 %v915, 0.0
  %v1180 = vmax.f32 %v917, 0.0
  %v1181 = vmax.f32 %v921, 0.0
  %v1182 = vmax.f32 %v923, 0.0
  %v1183 = vmax.f32 %v925, 0.0
  %v1184 = vmax.f32 %v927, 0.0
  %v1185 = vmax.f32 %v931, 0.0
  %v1186 = vmax.f32 %v933, 0.0
  %v1187 = vmax.f32 %v935, 0.0
  %v1188 = vmax.f32 %v937, 0.0
  %v1189 = vmax.f32 %v941, 0.0
  %v1190 = vmax.f32 %v943, 0.0
  %v1191 = vmax.f32 %v945, 0.0
  %v1192 = vmax.f32 %v947, 0.0
  %v1193 = vmax.f32 %v951, 0.0
  %v1194 = vmax.f32 %v953, 0.0
  %v1195 = vmax.f32 %v955, 0.0
  %v1196 = vmax.f32 %v957, 0.0
  %v1197 = vmax.f32 %v961, 0.0
  %v1198 = vmax.f32 %v963, 0.0
  %v1199 = vmax.f32 %v965, 0.0
  %v1200 = vmax.f32 %v967, 0.0
  %v1201 = vmax.f32 %v971, 0.0
  %v1202 = vmax.f32 %v973, 0.0
  %v1203 = vmax.f32 %v975, 0.0
  %v1204 = vmax.f32 %v977, 0.0
  %v1205 = vmax.f32 %v981, 0.0
  %v1206 = vmax.f32 %v983, 0.0
  %v1207 = vmax.f32 %v985, 0.0
  %v1208 = vmax.f32 %v987, 0.0
  %v1209 = vmax.f32 %v991, 0.0
  %v1210 = vmax.f32 %v993, 0.0
  %v1211 = vmax.f32 %v995, 0.0
  %v1212 = vmax.f32 %v997, 0.0
  %v1213 = vmax.f32 %v1001, 0.0
  %v1214 = vmax.f32 %v1003, 0.0
  %v1215 = vmax.f32 %v1005, 0.0
  %v1216 = vmax.f32 %v1007, 0.0
  %v1217 = vmax.f32 %v1011, 0.0
  %v1218 = vmax.f32 %v1013, 0.0
  %v1219 = vmax.f32 %v1015, 0.0
  %v1220 = vmax.f32 %v1017, 0.0
  %v1221 = vmax.f32 %v1021, 0.0
  %v1222 = vmax.f32 %v1023, 0.0
  %v1223 = vmax.f32 %v1025, 0.0
  %v1224 = vmax.f32 %v1027, 0.0
  %v1225 = vmax.f32 %v1031, 0.0
  %v1226 = vmax.f32 %v1033, 0.0
  %v1227 = vmax.f32 %v1035, 0.0
  %v1228 = vmax.f32 %v1037, 0.0
  %v1229 = vmax.f32 %v1041, 0.0
  %v1230 = vmax.f32 %v1043, 0.0
  %v1231 = vmax.f32 %v1045, 0.0
  %v1232 = vmax.f32 %v1047, 0.0
  %v1233 = vmax.f32 %v1051, 0.0
  %v1234 = vmax.f32 %v1053, 0.0
  %v1235 = vmax.f32 %v1055, 0.0
  %v1236 = vmax.f32 %v1057, 0.0
  %v1237 = vmax.f32 %v1061, 0.0
  %v1238 = vmax.f32 %v1063, 0.0
  %v1239 = vmax.f32 %v1065, 0.0
  %v1240 = vmax.f32 %v1067, 0.0
  %v1241 = vmax.f32 %v1071, 0.0
  %v1242 = vmax.f32 %v1073, 0.0
  %v1243 = vmax.f32 %v1075, 0.0
  %v1244 = vmax.f32 %v1077, 0.0
  %v1245 = vmax.f32 %v1081, 0.0
  %v1246 = vmax.f32 %v1083, 0.0
  %v1247 = vmax.f32 %v1085, 0.0
  %v1248 = vmax.f32 %v1087, 0.0
  %v1249 = vmax.f32 %v1091, 0.0
  %v1250 = vmax.f32 %v1093, 0.0
  %v1251 = vmax.f32 %v1095, 0.0
  %v1252 = vmax.f32 %v1097, 0.0
  %v1253 = vmax.f32 %v1101, 0.0
  %v1254 = vmax.f32 %v1103, 0.0
  %v1255 = vmax.f32 %v1105, 0.0
  %v1256 = vmax.f32 %v1107, 0.0
  %v1257 = vmax.f32 %v1111, 0.0
  %v1258 = vmax.f32 %v1113, 0.0
  %v1259 = vmax.f32 %v1115, 0.0
  %v1260 = vmax.f32 %v1117, 0.0
  %v1261 = vmax.f32 %v1121, 0.0
  %v1262 = vmax.f32 %v1123, 0.0
  %v1263 = vmax.f32 %v1125, 0.0
  %v1264 = vmax.f32 %v1127, 0.0
  %v1265 = vmax.f32 %v1131, 0.0
  %v1266 = vmax.f32 %v1133, 0.0
  %v1267 = vmax.f32 %v1135, 0.0
  %v1268 = vmax.f32 %v1137, 0.0
  %v1269 = vmax.f32 %v1141, 0.0
  %v1270 = vmax.f32 %v1143, 0.0
  %v1271 = vmax.f32 %v1145, 0.0
  %v1272 = vmax.f32 %v1147, 0.0
  %v1273 = vmax.f32 %v1151, 0.0
  %v1274 = vmax.f32 %v1153, 0.0
  %v1275 = vmax.f32 %v1155, 0.0
  %v1276 = vmax.f32 %v1157, 0.0
  %v1277 = vmax.f32 %v1161, 0.0
  %v1278 = vmax.f32 %v1163, 0.0
  %v1279 = vmax.f32 %v1165, 0.0
  %v1280 = vmax.f32 %v1167, 0.0
  %v1281 = vadd.f32 %v1169, %v1173
  %v1282 = vadd.f32 %v1170, %v1174
  %v1283 = vadd.f32 %v1171, %v1175
  %v1284 = vadd.f32 %v1172, %v1176
  %v1285 = vadd.f32 %v1177, %v1181
  %v1286 = vadd.f32 %v1178, %v1182
  %v1287 = vadd.f32 %v1179, %v1183
  %v1288 = vadd.f32 %v1180, %v1184
  %v1289 = vadd.f32 %v1185, %v1189
  %v1290 = vadd.f32 %v1186, %v1190
  %v1291 = vadd.f32 %v1187, %v1191
  %v1292 = vadd.f32 %v1188, %v1192
  %v1293 = vadd.f32 %v1193, %v1197
  %v1294 = vadd.f32 %v1194, %v1198
  %v1295 = vadd.f32 %v1195, %v1199
  %v1296 = vadd.f32 %v1196, %v1200
  %v1297 = vadd.f32 %v1201, %v1205
  %v1298 = vadd.f32 %v1202, %v1206
  %v1299 = vadd.f32 %v1203, %v1207
  %v1300 = vadd.f32 %v1204, %v1208
  %v1301 = vadd.f32 %v1209, %v1213
  %v1302 = vadd.f32 %v1210, %v1214
  %v1303 = vadd.f32 %v1211, %v1215
  %v1304 = vadd.f32 %v1212, %v1216
  %v1305 = vadd.f32 %v1217, %v1221
  %v1306 = vadd.f32 %v1218, %v1222
  %v1307 = vadd.f32 %v1219, %v1223
  %v1308 = vadd.f32 %v1220, %v1224
  %v1309 = vadd.f32 %v1225, %v1229
  %v1310 = vadd.f32 %v1226, %v1230
  %v1311 = vadd.f32 %v1227, %v1231
  %v1312 = vadd.f32 %v1228, %v1232
  %v1313 = vadd.f32 %v1233, %v1237
  %v1314 = vadd.f32 %v1234, %v1238
  %v1315 = vadd.f32 %v1235, %v1239
  %v1316 = vadd.f32 %v1236, %v1240
  %v1317 = vadd.f32 %v1241, %v1245
  %v1318 = vadd.f32 %v1242, %v1246
  %v1319 = vadd.f32 %v1243, %v1247
  %v1320 = vadd.f32 %v1244, %v1248
  %v1321 = vadd.f32 %v1249, %v1253
  %v1322 = vadd.f32 %v1250, %v1254
  %v1323 = vadd.f32 %v1251, %v1255
  %v1324 = vadd.f32 %v1252, %v1256
  %v1325 = vadd.f32 %v1257, %v1261
  %v1326 = vadd.f32 %v1258, %v1262
  %v1327 = vadd.f32 %v1259, %v1263
  %v1328 = vadd.f32 %v1260, %v1264
  %v1329 = vadd.f32 %v1265, %v1269
  %v1330 = vadd.f32 %v1266, %v1270
  %v1331 = vadd.f32 %v1267, %v1271
  %v1332 = vadd.f32 %v1268, %v1272
  %v1333 = vadd.f32 %v1273, %v1277
  %v1334 = vadd.f32 %v1274, %v1278
  %v1335 = vadd.f32 %v1275, %v1279
  %v1336 = vadd.f32 %v1276, %v1280
  %v1337 = vpack.c.bf16 %v1283, %v1281
  %v1338 = vpack.c.bf16 %v1284, %v1282
  %v1339 = vpack.c.bf16 %v1287, %v1285
  %v1340 = vpack.c.bf16 %v1288, %v1286
  %v1341 = vpack.c.bf16 %v1291, %v1289
  %v1342 = vpack.c.bf16 %v1292, %v1290
  %v1343 = vpack.c.bf16 %v1295, %v1293
  %v1344 = vpack.c.bf16 %v1296, %v1294
  %v1345 = vpack.c.bf16 %v1299, %v1297
  %v1346 = vpack.c.bf16 %v1300, %v1298
  %v1347 = vpack.c.bf16 %v1303, %v1301
  %v1348 = vpack.c.bf16 %v1304, %v1302
  %v1349 = vpack.c.bf16 %v1307, %v1305
  %v1350 = vpack.c.bf16 %v1308, %v1306
  %v1351 = vpack.c.bf16 %v1311, %v1309
  %v1352 = vpack.c.bf16 %v1312, %v1310
  %v1353 = vpack.c.bf16 %v1315, %v1313
  %v1354 = vpack.c.bf16 %v1316, %v1314
  %v1355 = vpack.c.bf16 %v1319, %v1317
  %v1356 = vpack.c.bf16 %v1320, %v1318
  %v1357 = vpack.c.bf16 %v1323, %v1321
  %v1358 = vpack.c.bf16 %v1324, %v1322
  %v1359 = vpack.c.bf16 %v1327, %v1325
  %v1360 = vpack.c.bf16 %v1328, %v1326
  %v1361 = vpack.c.bf16 %v1331, %v1329
  %v1362 = vpack.c.bf16 %v1332, %v1330
  %v1363 = vpack.c.bf16 %v1335, %v1333
  %v1364 = vpack.c.bf16 %v1336, %v1334
  %v1365 = vld [vmem:[%s3] sm:$0xf]
  %v1366 = vld [vmem:[%s3 + $0x4] sm:$0xf]
  %v1367 = vld [vmem:[%s3 + $0x8] sm:$0xf]
  %v1368 = vld [vmem:[%s3 + $0xc] sm:$0xf]
  %v1369 = vld [vmem:[%s3 + $0x10] sm:$0xf]
  %v1370 = vld [vmem:[%s3 + $0x14] sm:$0xf]
  %v1371 = vld [vmem:[%s3 + $0x18] sm:$0xf]
  %v1372 = vld [vmem:[%s3 + $0x1c] sm:$0xf]
  %v1373 = vld [vmem:[%s3 + $0x20] sm:$0xf]
  %v1374 = vld [vmem:[%s3 + $0x24] sm:$0xf]
  %v1375 = vld [vmem:[%s3 + $0x28] sm:$0xf]
  %v1376 = vld [vmem:[%s3 + $0x2c] sm:$0xf]
  %v1377 = vld [vmem:[%s3 + $0x30] sm:$0xf]
  %v1378 = vld [vmem:[%s3 + $0x34] sm:$0xf]
  %v1379 = vld [vmem:[%s3 + $0x38] sm:$0xf]
  %v1380 = vld [vmem:[%s3 + $0x3c] sm:$0xf]
  %v1381 = vld [vmem:[%s3 + $0x40] sm:$0xf]
  %v1382 = vld [vmem:[%s3 + $0x44] sm:$0xf]
  %v1383 = vld [vmem:[%s3 + $0x48] sm:$0xf]
  %v1384 = vld [vmem:[%s3 + $0x4c] sm:$0xf]
  %v1385 = vld [vmem:[%s3 + $0x50] sm:$0xf]
  %v1407 = vunpack.c.l.b16 %v1365
  %v1408 = vunpack.c.l.b16 %v1366
  %v1409 = vunpack.c.l.b16 %v1367
  %v1410 = vunpack.c.l.b16 %v1368
  %v1411 = vunpack.c.l.b16 %v1369
  %v1412 = vunpack.c.l.b16 %v1370
  %v1413 = vunpack.c.l.b16 %v1371
  %v1414 = vunpack.c.l.b16 %v1372
  %v1415 = vunpack.c.l.b16 %v1373
  %v1416 = vunpack.c.l.b16 %v1374
  %v1417 = vunpack.c.l.b16 %v1375
  %v1418 = vunpack.c.l.b16 %v1376
  %v1419 = vunpack.c.l.b16 %v1377
  %v1420 = vunpack.c.l.b16 %v1378
  %v1421 = vunpack.c.l.b16 %v1379
  %v1422 = vunpack.c.l.b16 %v1380
  %v1423 = vunpack.c.l.b16 %v1381
  %v1424 = vunpack.c.l.b16 %v1382
  %v1425 = vunpack.c.l.b16 %v1383
  %v1426 = vunpack.c.l.b16 %v1384
  %v1427 = vunpack.c.l.b16 %v1385
  %v1428 = vpack.c.b16 %v1408, %v1407
  %v1429 = vpack.c.b16 %v1410, %v1409
  %v1430 = vpack.c.b16 %v1412, %v1411
  %v1431 = vpack.c.b16 %v1414, %v1413
  %v1432 = vpack.c.b16 %v1416, %v1415
  %v1433 = vpack.c.b16 %v1418, %v1417
  %v1434 = vpack.c.b16 %v1420, %v1419
  %v1435 = vpack.c.b16 %v1422, %v1421
  %v1436 = vpack.c.b16 %v1424, %v1423
  %v1437 = vpack.c.b16 %v1426, %v1425
  %v1438 = vpack.c.b16 %v1427, %v1427
  %vm1449 = vcmask 326656
  %v1451 = vsel %vm1449, %v1338, 0
  %v1454 = vsel %vm1449, %v1340, 0
  %v1457 = vsel %vm1449, %v1342, 0
  %v1460 = vsel %vm1449, %v1344, 0
  %v1463 = vsel %vm1449, %v1346, 0
  %v1466 = vsel %vm1449, %v1348, 0
  %v1469 = vsel %vm1449, %v1350, 0
  %v1472 = vsel %vm1449, %v1352, 0
  %v1475 = vsel %vm1449, %v1354, 0
  %v1478 = vsel %vm1449, %v1356, 0
  %v1481 = vsel %vm1449, %v1358, 0
  %v1484 = vsel %vm1449, %v1360, 0
  %v1487 = vsel %vm1449, %v1362, 0
  %v1490 = vsel %vm1449, %v1364, 0
  %vm1492 = vcmask 1043456
  %v1494 = vsel %vm1492, %v1438, 0
  %1496 = vmatprep.subr.bf16.mxu0 0
  %1497 = vmatpush1.bf16.msra.mxu0 %v1428
  %1498 = vmatprep.subr.bf16.mxu0 0
  %1499 = vmatpush1.bf16.msra.mxu0 %v1429
  %1500 = vmatprep.subr.bf16.mxu0 0
  %1501 = vmatpush1.bf16.msra.mxu0 %v1430
  %1502 = vmatprep.subr.bf16.mxu0 0
  %1503 = vmatpush1.bf16.msra.mxu0 %v1431
  %1504 = vmatprep.subr.bf16.mxu0 0
  %1505 = vmatpush1.bf16.msra.mxu0 %v1432
  %1506 = vmatprep.subr.bf16.mxu0 0
  %1507 = vmatpush1.bf16.msra.mxu0 %v1433
  %1508 = vmatprep.subr.bf16.mxu0 0
  %1509 = vmatpush1.bf16.msra.mxu0 %v1434
  %1510 = vmatprep.subr.bf16.mxu0 0
  %1511 = vmatpush1.bf16.msra.mxu0 %v1435
  %1512 = vmatprep.subr.bf16.mxu0 0
  %1513 = vmatpush1.bf16.msra.mxu0 %v1436
  %1514 = vmatprep.subr.bf16.mxu0 0
  %1515 = vmatpush1.bf16.msra.mxu0 %v1437
  %1516 = vmatprep.subr.bf16.mxu0 0
  %1517 = vmatpush1.bf16.msra.mxu0 %v1494
  %1518 = vmatprep.subr.bf16.mxu0 0
  %1519 = vmatpush1.bf16.msra.mxu0 0
  %1520 = vmatprep.subr.bf16.mxu0 0
  %1521 = vmatpush1.bf16.msra.mxu0 0
  %1522 = vmatprep.subr.bf16.mxu0 0
  %1523 = vmatpush1.bf16.msra.mxu0 0
  %1524 = vmatprep.subr.bf16.mxu0 0
  %1525 = vmatpush1.bf16.msra.mxu0 0
  %1526 = vmatprep.subr.bf16.mxu0 0
  %1527 = vmatpush1.bf16.msra.mxu0 0
  %1528 = vmatprep.mubr.bf16.mxu0 %v1451
  %1529 = vmatmul.mubr.bf16.gmra.mrb[0].mxu0 %v1337
  %v1530 = vpop.f32.mrb[0].mxu0
  %v1531 = vadd.f32 0.0, %v1530
  %v1532 = vpop.f32.mrb[0].mxu0
  %v1533 = vpop.f32.mrb[0].mxu0
  %v1534 = vadd.f32 0.0, %v1533
  %v1535 = vpop.f32.mrb[0].mxu0
  %1536 = vmatprep.mubr.bf16.mxu0 %v1454
  %1537 = vmatmul.mubr.bf16.gmra.mrb[0].mxu0 %v1339
  %v1538 = vpop.f32.mrb[0].mxu0
  %v1539 = vadd.f32 0.0, %v1538
  %v1540 = vpop.f32.mrb[0].mxu0
  %v1541 = vpop.f32.mrb[0].mxu0
  %v1542 = vadd.f32 0.0, %v1541
  %v1543 = vpop.f32.mrb[0].mxu0
  %1544 = vmatprep.mubr.bf16.mxu0 %v1457
  %1545 = vmatmul.mubr.bf16.gmra.mrb[0].mxu0 %v1341
  %v1546 = vpop.f32.mrb[0].mxu0
  %v1547 = vadd.f32 0.0, %v1546
  %v1548 = vpop.f32.mrb[0].mxu0
  %v1549 = vpop.f32.mrb[0].mxu0
  %v1550 = vadd.f32 0.0, %v1549
  %v1551 = vpop.f32.mrb[0].mxu0
  %1552 = vmatprep.mubr.bf16.mxu0 %v1460
  %1553 = vmatmul.mubr.bf16.gmra.mrb[0].mxu0 %v1343
  %v1554 = vpop.f32.mrb[0].mxu0
  %v1555 = vadd.f32 0.0, %v1554
  %v1556 = vpop.f32.mrb[0].mxu0
  %v1557 = vpop.f32.mrb[0].mxu0
  %v1558 = vadd.f32 0.0, %v1557
  %v1559 = vpop.f32.mrb[0].mxu0
  %1560 = vmatprep.mubr.bf16.mxu0 %v1463
  %1561 = vmatmul.mubr.bf16.gmra.mrb[0].mxu0 %v1345
  %v1562 = vpop.f32.mrb[0].mxu0
  %v1563 = vadd.f32 0.0, %v1562
  %v1564 = vpop.f32.mrb[0].mxu0
  %v1565 = vpop.f32.mrb[0].mxu0
  %v1566 = vadd.f32 0.0, %v1565
  %v1567 = vpop.f32.mrb[0].mxu0
  %1568 = vmatprep.mubr.bf16.mxu0 %v1466
  %1569 = vmatmul.mubr.bf16.gmra.mrb[0].mxu0 %v1347
  %v1570 = vpop.f32.mrb[0].mxu0
  %v1571 = vadd.f32 0.0, %v1570
  %v1572 = vpop.f32.mrb[0].mxu0
  %v1573 = vpop.f32.mrb[0].mxu0
  %v1574 = vadd.f32 0.0, %v1573
  %v1575 = vpop.f32.mrb[0].mxu0
  %1576 = vmatprep.mubr.bf16.mxu0 %v1469
  %1577 = vmatmul.mubr.bf16.gmra.mrb[0].mxu0 %v1349
  %v1578 = vpop.f32.mrb[0].mxu0
  %v1579 = vadd.f32 0.0, %v1578
  %v1580 = vpop.f32.mrb[0].mxu0
  %v1581 = vpop.f32.mrb[0].mxu0
  %v1582 = vadd.f32 0.0, %v1581
  %v1583 = vpop.f32.mrb[0].mxu0
  %1584 = vmatprep.mubr.bf16.mxu0 %v1472
  %1585 = vmatmul.mubr.bf16.gmra.mrb[0].mxu0 %v1351
  %v1586 = vpop.f32.mrb[0].mxu0
  %v1587 = vadd.f32 0.0, %v1586
  %v1588 = vpop.f32.mrb[0].mxu0
  %v1589 = vpop.f32.mrb[0].mxu0
  %v1590 = vadd.f32 0.0, %v1589
  %v1591 = vpop.f32.mrb[0].mxu0
  %1592 = vmatprep.mubr.bf16.mxu0 %v1475
  %1593 = vmatmul.mubr.bf16.gmra.mrb[0].mxu0 %v1353
  %v1594 = vpop.f32.mrb[0].mxu0
  %v1595 = vadd.f32 0.0, %v1594
  %v1596 = vpop.f32.mrb[0].mxu0
  %v1597 = vpop.f32.mrb[0].mxu0
  %v1598 = vadd.f32 0.0, %v1597
  %v1599 = vpop.f32.mrb[0].mxu0
  %1600 = vmatprep.mubr.bf16.mxu0 %v1478
  %1601 = vmatmul.mubr.bf16.gmra.mrb[0].mxu0 %v1355
  %v1602 = vpop.f32.mrb[0].mxu0
  %v1603 = vadd.f32 0.0, %v1602
  %v1604 = vpop.f32.mrb[0].mxu0
  %v1605 = vpop.f32.mrb[0].mxu0
  %v1606 = vadd.f32 0.0, %v1605
  %v1607 = vpop.f32.mrb[0].mxu0
  %1608 = vmatprep.mubr.bf16.mxu0 %v1481
  %1609 = vmatmul.mubr.bf16.gmra.mrb[0].mxu0 %v1357
  %v1610 = vpop.f32.mrb[0].mxu0
  %v1611 = vadd.f32 0.0, %v1610
  %v1612 = vpop.f32.mrb[0].mxu0
  %v1613 = vpop.f32.mrb[0].mxu0
  %v1614 = vadd.f32 0.0, %v1613
  %v1615 = vpop.f32.mrb[0].mxu0
  %1616 = vmatprep.mubr.bf16.mxu0 %v1484
  %1617 = vmatmul.mubr.bf16.gmra.mrb[0].mxu0 %v1359
  %v1618 = vpop.f32.mrb[0].mxu0
  %v1619 = vadd.f32 0.0, %v1618
  %v1620 = vpop.f32.mrb[0].mxu0
  %v1621 = vpop.f32.mrb[0].mxu0
  %v1622 = vadd.f32 0.0, %v1621
  %v1623 = vpop.f32.mrb[0].mxu0
  %1624 = vmatprep.mubr.bf16.mxu0 %v1487
  %1625 = vmatmul.mubr.bf16.gmra.mrb[0].mxu0 %v1361
  %v1626 = vpop.f32.mrb[0].mxu0
  %v1627 = vadd.f32 0.0, %v1626
  %v1628 = vpop.f32.mrb[0].mxu0
  %v1629 = vpop.f32.mrb[0].mxu0
  %v1630 = vadd.f32 0.0, %v1629
  %v1631 = vpop.f32.mrb[0].mxu0
  %1632 = vmatprep.mubr.bf16.mxu0 %v1490
  %1633 = vmatmul.mubr.bf16.gmra.mrb[0].mxu0 %v1363
  %v1634 = vpop.f32.mrb[0].mxu0
  %v1635 = vadd.f32 0.0, %v1634
  %v1636 = vpop.f32.mrb[0].mxu0
  %v1637 = vpop.f32.mrb[0].mxu0
  %v1638 = vadd.f32 0.0, %v1637
  %v1639 = vpop.f32.mrb[0].mxu0
  %1640 = vdwg.mxu0
  %v1641 = vpack.c.bf16 %v1534, %v1531
  %v1642 = vpack.c.bf16 %v1542, %v1539
  %v1643 = vpack.c.bf16 %v1550, %v1547
  %v1644 = vpack.c.bf16 %v1558, %v1555
  %v1645 = vpack.c.bf16 %v1566, %v1563
  %v1646 = vpack.c.bf16 %v1574, %v1571
  %v1647 = vpack.c.bf16 %v1582, %v1579
  %v1648 = vpack.c.bf16 %v1590, %v1587
  %v1649 = vpack.c.bf16 %v1598, %v1595
  %v1650 = vpack.c.bf16 %v1606, %v1603
  %v1651 = vpack.c.bf16 %v1614, %v1611
  %v1652 = vpack.c.bf16 %v1622, %v1619
  %v1653 = vpack.c.bf16 %v1630, %v1627
  %v1654 = vpack.c.bf16 %v1638, %v1635
  %1665 = vrot.lane.b32.xlu0 %v1642, 84
  %v1666 = vpop.permute.xlu0 %1665
  %1667 = vrot.lane.b32.xlu0 %v1643, 84
  %v1668 = vpop.permute.xlu0 %1667
  %1669 = vrot.lane.b32.xlu0 %v1644, 84
  %v1670 = vpop.permute.xlu0 %1669
  %1671 = vrot.lane.b32.xlu0 %v1645, 84
  %v1672 = vpop.permute.xlu0 %1671
  %1673 = vrot.lane.b32.xlu0 %v1646, 84
  %v1674 = vpop.permute.xlu0 %1673
  %1675 = vrot.lane.b32.xlu0 %v1647, 84
  %v1676 = vpop.permute.xlu0 %1675
  %1677 = vrot.lane.b32.xlu0 %v1648, 84
  %v1678 = vpop.permute.xlu0 %1677
  %1679 = vrot.lane.b32.xlu0 %v1649, 84
  %v1680 = vpop.permute.xlu0 %1679
  %1681 = vrot.lane.b32.xlu0 %v1650, 84
  %v1682 = vpop.permute.xlu0 %1681
  %1683 = vrot.lane.b32.xlu0 %v1651, 84
  %v1684 = vpop.permute.xlu0 %1683
  %1686 = vrot.lane.b32.xlu0 %v1643, 40
  %v1687 = vpop.permute.xlu0 %1686
  %1688 = vrot.lane.b32.xlu0 %v1644, 40
  %v1689 = vpop.permute.xlu0 %1688
  %1690 = vrot.lane.b32.xlu0 %v1645, 40
  %v1691 = vpop.permute.xlu0 %1690
  %1692 = vrot.lane.b32.xlu0 %v1646, 40
  %v1693 = vpop.permute.xlu0 %1692
  %1694 = vrot.lane.b32.xlu0 %v1647, 40
  %v1695 = vpop.permute.xlu0 %1694
  %1696 = vrot.lane.b32.xlu0 %v1648, 40
  %v1697 = vpop.permute.xlu0 %1696
  %1698 = vrot.lane.b32.xlu0 %v1649, 40
  %v1699 = vpop.permute.xlu0 %1698
  %1700 = vrot.lane.b32.xlu0 %v1650, 40
  %v1701 = vpop.permute.xlu0 %1700
  %1702 = vrot.lane.b32.xlu0 %v1651, 40
  %v1703 = vpop.permute.xlu0 %1702
  %1704 = vrot.lane.b32.xlu0 %v1652, 40
  %v1705 = vpop.permute.xlu0 %1704
  %1707 = vrot.lane.b32.xlu0 %v1644, 124
  %v1708 = vpop.permute.xlu0 %1707
  %1709 = vrot.lane.b32.xlu0 %v1645, 124
  %v1710 = vpop.permute.xlu0 %1709
  %1711 = vrot.lane.b32.xlu0 %v1646, 124
  %v1712 = vpop.permute.xlu0 %1711
  %1713 = vrot.lane.b32.xlu0 %v1647, 124
  %v1714 = vpop.permute.xlu0 %1713
  %1715 = vrot.lane.b32.xlu0 %v1648, 124
  %v1716 = vpop.permute.xlu0 %1715
  %1717 = vrot.lane.b32.xlu0 %v1649, 124
  %v1718 = vpop.permute.xlu0 %1717
  %1719 = vrot.lane.b32.xlu0 %v1650, 124
  %v1720 = vpop.permute.xlu0 %1719
  %1721 = vrot.lane.b32.xlu0 %v1651, 124
  %v1722 = vpop.permute.xlu0 %1721
  %1723 = vrot.lane.b32.xlu0 %v1652, 124
  %v1724 = vpop.permute.xlu0 %1723
  %1725 = vrot.lane.b32.xlu0 %v1653, 124
  %v1726 = vpop.permute.xlu0 %1725
  %1728 = vrot.lane.b32.xlu0 %v1645, 80
  %v1729 = vpop.permute.xlu0 %1728
  %1730 = vrot.lane.b32.xlu0 %v1646, 80
  %v1731 = vpop.permute.xlu0 %1730
  %1732 = vrot.lane.b32.xlu0 %v1647, 80
  %v1733 = vpop.permute.xlu0 %1732
  %1734 = vrot.lane.b32.xlu0 %v1648, 80
  %v1735 = vpop.permute.xlu0 %1734
  %1736 = vrot.lane.b32.xlu0 %v1649, 80
  %v1737 = vpop.permute.xlu0 %1736
  %1738 = vrot.lane.b32.xlu0 %v1650, 80
  %v1739 = vpop.permute.xlu0 %1738
  %1740 = vrot.lane.b32.xlu0 %v1651, 80
  %v1741 = vpop.permute.xlu0 %1740
  %1742 = vrot.lane.b32.xlu0 %v1652, 80
  %v1743 = vpop.permute.xlu0 %1742
  %1744 = vrot.lane.b32.xlu0 %v1653, 80
  %v1745 = vpop.permute.xlu0 %1744
  %1746 = vrot.lane.b32.xlu0 %v1654, 80
  %v1747 = vpop.permute.xlu0 %1746
  %vm1748 = vcmask 687104
  %v1751 = vsel %vm1748, %v1641, %v1666
  %v1755 = vsel %vm1748, %v1642, %v1668
  %v1759 = vsel %vm1748, %v1643, %v1670
  %v1763 = vsel %vm1748, %v1644, %v1672
  %v1767 = vsel %vm1748, %v1645, %v1674
  %v1771 = vsel %vm1748, %v1646, %v1676
  %v1775 = vsel %vm1748, %v1647, %v1678
  %v1779 = vsel %vm1748, %v1648, %v1680
  %v1783 = vsel %vm1748, %v1649, %v1682
  %v1787 = vsel %vm1748, %v1650, %v1684
  %v1790 = vsel %vm1449, %v1666, %v1687
  %v1792 = vsel %vm1449, %v1668, %v1689
  %v1794 = vsel %vm1449, %v1670, %v1691
  %v1796 = vsel %vm1449, %v1672, %v1693
  %v1798 = vsel %vm1449, %v1674, %v1695
  %v1800 = vsel %vm1449, %v1676, %v1697
  %v1802 = vsel %vm1449, %v1678, %v1699
  %v1804 = vsel %vm1449, %v1680, %v1701
  %v1806 = vsel %vm1449, %v1682, %v1703
  %v1808 = vsel %vm1449, %v1684, %v1705
  %vm1809 = vcmask 1014784
  %v1811 = vsel %vm1809, %v1790, %v1708
  %v1814 = vsel %vm1809, %v1792, %v1710
  %v1817 = vsel %vm1809, %v1794, %v1712
  %v1820 = vsel %vm1809, %v1796, %v1714
  %v1823 = vsel %vm1809, %v1798, %v1716
  %v1826 = vsel %vm1809, %v1800, %v1718
  %v1829 = vsel %vm1809, %v1802, %v1720
  %v1832 = vsel %vm1809, %v1804, %v1722
  %v1835 = vsel %vm1809, %v1806, %v1724
  %v1838 = vsel %vm1809, %v1808, %v1726
  %vm1840 = vcmask 654336
  %v1842 = vsel %vm1840, %v1708, %v1729
  %v1845 = vsel %vm1840, %v1710, %v1731
  %v1848 = vsel %vm1840, %v1712, %v1733
  %v1851 = vsel %vm1840, %v1714, %v1735
  %v1854 = vsel %vm1840, %v1716, %v1737
  %v1857 = vsel %vm1840, %v1718, %v1739
  %v1860 = vsel %vm1840, %v1720, %v1741
  %v1863 = vsel %vm1840, %v1722, %v1743
  %v1866 = vsel %vm1840, %v1724, %v1745
  %v1869 = vsel %vm1840, %v1726, %v1747
  %v1871 = vld [vmem:[%s4] sm:$0xff]
  %v1872 = vld [vmem:[%s4 + $0x8] sm:$0xff]
  %v1873 = vld [vmem:[%s4 + $0x10] sm:$0xff]
  %v1874 = vld [vmem:[%s4 + $0x18] sm:$0xff]
  %v1875 = vld [vmem:[%s4 + $0x20] sm:$0xff]
  %v1876 = vld [vmem:[%s4 + $0x28] sm:$0xff]
  %v1877 = vld [vmem:[%s4 + $0x30] sm:$0xff]
  %v1878 = vld [vmem:[%s4 + $0x38] sm:$0xff]
  %v1879 = vld [vmem:[%s4 + $0x40] sm:$0xff]
  %v1880 = vld [vmem:[%s4 + $0x48] sm:$0xff]
  %v1881 = vld [vmem:[%s4 + $0x50] sm:$0xff]
  %v1882 = vld [vmem:[%s4 + $0x58] sm:$0xff]
  %v1883 = vld [vmem:[%s4 + $0x60] sm:$0xff]
  %v1884 = vld [vmem:[%s4 + $0x68] sm:$0xff]
  %v1885 = vld [vmem:[%s4 + $0x70] sm:$0xff]
  %v1886 = vld [vmem:[%s4 + $0x78] sm:$0xff]
  %v1887 = vld [vmem:[%s4 + $0x80] sm:$0xff]
  %v1888 = vld [vmem:[%s4 + $0x88] sm:$0xff]
  %v1889 = vld [vmem:[%s4 + $0x90] sm:$0xff]
  %v1890 = vld [vmem:[%s4 + $0x98] sm:$0xff]
  %v1891 = vld [vmem:[%s4 + $0xa0] sm:$0xff]
  %v1892 = vld [vmem:[%s4 + $0xa8] sm:$0xff]
  %v1893 = vld [vmem:[%s4 + $0xb0] sm:$0xff]
  %v1894 = vld [vmem:[%s4 + $0xb8] sm:$0xff]
  %v1895 = vld [vmem:[%s4 + $0xc0] sm:$0xff]
  %v1896 = vld [vmem:[%s4 + $0xc8] sm:$0xff]
  %v1897 = vld [vmem:[%s4 + $0xd0] sm:$0xff]
  %v1898 = vld [vmem:[%s4 + $0xd8] sm:$0xff]
  %v1899 = vld [vmem:[%s4 + $0xe0] sm:$0xff]
  %v1900 = vld [vmem:[%s4 + $0xe8] sm:$0xff]
  %v1901 = vld [vmem:[%s4 + $0xf0] sm:$0xff]
  %v1902 = vld [vmem:[%s4 + $0xf8] sm:$0xff]
  %v1903 = vld [vmem:[%s4 + $0x100] sm:$0xff]
  %v1904 = vld [vmem:[%s4 + $0x108] sm:$0xff]
  %v1905 = vld [vmem:[%s4 + $0x110] sm:$0xff]
  %v1906 = vld [vmem:[%s4 + $0x118] sm:$0xff]
  %v1907 = vld [vmem:[%s4 + $0x120] sm:$0xff]
  %v1908 = vld [vmem:[%s4 + $0x128] sm:$0xff]
  %v1909 = vld [vmem:[%s4 + $0x130] sm:$0xff]
  %v1910 = vld [vmem:[%s4 + $0x138] sm:$0xff]
  %v1911 = vld [vmem:[%s4 + $0x140] sm:$0xff]
  %v1912 = vld [vmem:[%s4 + $0x148] sm:$0xff]
  %v1913 = vld [vmem:[%s4 + $0x150] sm:$0xff]
  %v1914 = vld [vmem:[%s4 + $0x158] sm:$0xff]
  %v1915 = vld [vmem:[%s4 + $0x160] sm:$0xff]
  %v1916 = vld [vmem:[%s4 + $0x168] sm:$0xff]
  %v1917 = vld [vmem:[%s4 + $0x170] sm:$0xff]
  %v1918 = vld [vmem:[%s4 + $0x178] sm:$0xff]
  %v1919 = vld [vmem:[%s4 + $0x180] sm:$0xff]
  %v1920 = vld [vmem:[%s4 + $0x188] sm:$0xff]
  %v1921 = vld [vmem:[%s4 + $0x190] sm:$0xff]
  %v1922 = vld [vmem:[%s4 + $0x198] sm:$0xff]
  %v1923 = vld [vmem:[%s4 + $0x1a0] sm:$0x33]
  %v1924 = vld [vmem:[%s5] sm:$0x3]
  %v1926 = vlaneseq
  %v1927 = vshrl.u32 %v1926, 7
  %v1928 = vsub.s32 0, %v1927
  %v1929 = vrot.slane %v1924, %v1928
  %v1930 = vlaneseq
  %v1931 = vshrl.u32 %v1930, 7
  %v1932 = vsub.s32 1, %v1931
  %v1933 = vrot.slane %v1924, %v1932
  %v1989 = vunpack.c.l.b16 %v1871
  %v1990 = vunpack.c.h.b16 %v1871
  %v1991 = vunpack.c.l.b16 %v1872
  %v1992 = vunpack.c.h.b16 %v1872
  %v1993 = vunpack.c.l.b16 %v1873
  %v1994 = vunpack.c.h.b16 %v1873
  %v1995 = vunpack.c.l.b16 %v1874
  %v1996 = vunpack.c.h.b16 %v1874
  %v1997 = vunpack.c.l.b16 %v1875
  %v1998 = vunpack.c.h.b16 %v1875
  %v1999 = vunpack.c.l.b16 %v1876
  %v2000 = vunpack.c.h.b16 %v1876
  %v2001 = vunpack.c.l.b16 %v1877
  %v2002 = vunpack.c.h.b16 %v1877
  %v2003 = vunpack.c.l.b16 %v1878
  %v2004 = vunpack.c.h.b16 %v1878
  %v2005 = vunpack.c.l.b16 %v1879
  %v2006 = vunpack.c.h.b16 %v1879
  %v2007 = vunpack.c.l.b16 %v1880
  %v2008 = vunpack.c.h.b16 %v1880
  %v2009 = vunpack.c.l.b16 %v1881
  %v2010 = vunpack.c.h.b16 %v1881
  %v2011 = vunpack.c.l.b16 %v1882
  %v2012 = vunpack.c.h.b16 %v1882
  %v2013 = vunpack.c.l.b16 %v1883
  %v2014 = vunpack.c.h.b16 %v1883
  %v2015 = vunpack.c.l.b16 %v1884
  %v2016 = vunpack.c.h.b16 %v1884
  %v2017 = vunpack.c.l.b16 %v1885
  %v2018 = vunpack.c.h.b16 %v1885
  %v2019 = vunpack.c.l.b16 %v1886
  %v2020 = vunpack.c.h.b16 %v1886
  %v2021 = vunpack.c.l.b16 %v1887
  %v2022 = vunpack.c.h.b16 %v1887
  %v2023 = vunpack.c.l.b16 %v1888
  %v2024 = vunpack.c.h.b16 %v1888
  %v2025 = vunpack.c.l.b16 %v1889
  %v2026 = vunpack.c.h.b16 %v1889
  %v2027 = vunpack.c.l.b16 %v1890
  %v2028 = vunpack.c.h.b16 %v1890
  %v2029 = vunpack.c.l.b16 %v1891
  %v2030 = vunpack.c.h.b16 %v1891
  %v2031 = vunpack.c.l.b16 %v1892
  %v2032 = vunpack.c.h.b16 %v1892
  %v2033 = vunpack.c.l.b16 %v1893
  %v2034 = vunpack.c.h.b16 %v1893
  %v2035 = vunpack.c.l.b16 %v1894
  %v2036 = vunpack.c.h.b16 %v1894
  %v2037 = vunpack.c.l.b16 %v1895
  %v2038 = vunpack.c.h.b16 %v1895
  %v2039 = vunpack.c.l.b16 %v1896
  %v2040 = vunpack.c.h.b16 %v1896
  %v2041 = vunpack.c.l.b16 %v1897
  %v2042 = vunpack.c.h.b16 %v1897
  %v2043 = vunpack.c.l.b16 %v1898
  %v2044 = vunpack.c.h.b16 %v1898
  %v2045 = vunpack.c.l.b16 %v1899
  %v2046 = vunpack.c.h.b16 %v1899
  %v2047 = vunpack.c.l.b16 %v1900
  %v2048 = vunpack.c.h.b16 %v1900
  %v2049 = vunpack.c.l.b16 %v1901
  %v2050 = vunpack.c.h.b16 %v1901
  %v2051 = vunpack.c.l.b16 %v1902
  %v2052 = vunpack.c.h.b16 %v1902
  %v2053 = vunpack.c.l.b16 %v1903
  %v2054 = vunpack.c.h.b16 %v1903
  %v2055 = vunpack.c.l.b16 %v1904
  %v2056 = vunpack.c.h.b16 %v1904
  %v2057 = vunpack.c.l.b16 %v1905
  %v2058 = vunpack.c.h.b16 %v1905
  %v2059 = vunpack.c.l.b16 %v1906
  %v2060 = vunpack.c.h.b16 %v1906
  %v2061 = vunpack.c.l.b16 %v1907
  %v2062 = vunpack.c.h.b16 %v1907
  %v2063 = vunpack.c.l.b16 %v1908
  %v2064 = vunpack.c.h.b16 %v1908
  %v2065 = vunpack.c.l.b16 %v1909
  %v2066 = vunpack.c.h.b16 %v1909
  %v2067 = vunpack.c.l.b16 %v1910
  %v2068 = vunpack.c.h.b16 %v1910
  %v2069 = vunpack.c.l.b16 %v1911
  %v2070 = vunpack.c.h.b16 %v1911
  %v2071 = vunpack.c.l.b16 %v1912
  %v2072 = vunpack.c.h.b16 %v1912
  %v2073 = vunpack.c.l.b16 %v1913
  %v2074 = vunpack.c.h.b16 %v1913
  %v2075 = vunpack.c.l.b16 %v1914
  %v2076 = vunpack.c.h.b16 %v1914
  %v2077 = vunpack.c.l.b16 %v1915
  %v2078 = vunpack.c.h.b16 %v1915
  %v2079 = vunpack.c.l.b16 %v1916
  %v2080 = vunpack.c.h.b16 %v1916
  %v2081 = vunpack.c.l.b16 %v1917
  %v2082 = vunpack.c.h.b16 %v1917
  %v2083 = vunpack.c.l.b16 %v1918
  %v2084 = vunpack.c.h.b16 %v1918
  %v2085 = vunpack.c.l.b16 %v1919
  %v2086 = vunpack.c.h.b16 %v1919
  %v2087 = vunpack.c.l.b16 %v1920
  %v2088 = vunpack.c.h.b16 %v1920
  %v2089 = vunpack.c.l.b16 %v1921
  %v2090 = vunpack.c.h.b16 %v1921
  %v2091 = vunpack.c.l.b16 %v1922
  %v2092 = vunpack.c.h.b16 %v1922
  %v2093 = vunpack.c.l.b16 %v1923
  %v2094 = vunpack.c.h.b16 %v1923
  %v2095 = vpack.c.b16 %v1991, %v1989
  %v2096 = vpack.c.b16 %v1992, %v1990
  %v2097 = vpack.c.b16 %v1995, %v1993
  %v2098 = vpack.c.b16 %v1996, %v1994
  %v2099 = vpack.c.b16 %v1999, %v1997
  %v2100 = vpack.c.b16 %v2000, %v1998
  %v2101 = vpack.c.b16 %v2003, %v2001
  %v2102 = vpack.c.b16 %v2004, %v2002
  %v2103 = vpack.c.b16 %v2007, %v2005
  %v2104 = vpack.c.b16 %v2008, %v2006
  %v2105 = vpack.c.b16 %v2011, %v2009
  %v2106 = vpack.c.b16 %v2012, %v2010
  %v2107 = vpack.c.b16 %v2015, %v2013
  %v2108 = vpack.c.b16 %v2016, %v2014
  %v2109 = vpack.c.b16 %v2019, %v2017
  %v2110 = vpack.c.b16 %v2020, %v2018
  %v2111 = vpack.c.b16 %v2023, %v2021
  %v2112 = vpack.c.b16 %v2024, %v2022
  %v2113 = vpack.c.b16 %v2027, %v2025
  %v2114 = vpack.c.b16 %v2028, %v2026
  %v2115 = vpack.c.b16 %v2031, %v2029
  %v2116 = vpack.c.b16 %v2032, %v2030
  %v2117 = vpack.c.b16 %v2035, %v2033
  %v2118 = vpack.c.b16 %v2036, %v2034
  %v2119 = vpack.c.b16 %v2039, %v2037
  %v2120 = vpack.c.b16 %v2040, %v2038
  %v2121 = vpack.c.b16 %v2043, %v2041
  %v2122 = vpack.c.b16 %v2044, %v2042
  %v2123 = vpack.c.b16 %v2047, %v2045
  %v2124 = vpack.c.b16 %v2048, %v2046
  %v2125 = vpack.c.b16 %v2051, %v2049
  %v2126 = vpack.c.b16 %v2052, %v2050
  %v2127 = vpack.c.b16 %v2055, %v2053
  %v2128 = vpack.c.b16 %v2056, %v2054
  %v2129 = vpack.c.b16 %v2059, %v2057
  %v2130 = vpack.c.b16 %v2060, %v2058
  %v2131 = vpack.c.b16 %v2063, %v2061
  %v2132 = vpack.c.b16 %v2064, %v2062
  %v2133 = vpack.c.b16 %v2067, %v2065
  %v2134 = vpack.c.b16 %v2068, %v2066
  %v2135 = vpack.c.b16 %v2071, %v2069
  %v2136 = vpack.c.b16 %v2072, %v2070
  %v2137 = vpack.c.b16 %v2075, %v2073
  %v2138 = vpack.c.b16 %v2076, %v2074
  %v2139 = vpack.c.b16 %v2079, %v2077
  %v2140 = vpack.c.b16 %v2080, %v2078
  %v2141 = vpack.c.b16 %v2083, %v2081
  %v2142 = vpack.c.b16 %v2084, %v2082
  %v2143 = vpack.c.b16 %v2087, %v2085
  %v2144 = vpack.c.b16 %v2088, %v2086
  %v2145 = vpack.c.b16 %v2091, %v2089
  %v2146 = vpack.c.b16 %v2092, %v2090
  %v2147 = vpack.c.b16 %v2093, %v2093
  %v2148 = vpack.c.b16 %v2094, %v2094
  %vm2201 = vcmask 293888
  %v2202 = vsel %vm2201, %v1729, 0
  %v2204 = vsel %vm2201, %v1731, 0
  %v2206 = vsel %vm2201, %v1733, 0
  %v2208 = vsel %vm2201, %v1735, 0
  %v2210 = vsel %vm2201, %v1737, 0
  %v2212 = vsel %vm2201, %v1739, 0
  %v2214 = vsel %vm2201, %v1741, 0
  %v2216 = vsel %vm2201, %v1743, 0
  %v2218 = vsel %vm2201, %v1745, 0
  %v2220 = vsel %vm2201, %v1747, 0
  %vm2222 = vcmask 1041408
  %v2224 = vsel %vm2222, %v2147, 0
  %v2227 = vsel %vm2222, %v2148, 0
  %2229 = vmatprep.subr.bf16.mxu0 %v2096
  %2230 = vmatpush1.bf16.msra.mxu0 %v2095
  %2231 = vmatprep.subr.bf16.mxu0 %v2098
  %2232 = vmatpush1.bf16.msra.mxu0 %v2097
  %2233 = vmatprep.subr.bf16.mxu0 %v2100
  %2234 = vmatpush1.bf16.msra.mxu0 %v2099
  %2235 = vmatprep.subr.bf16.mxu0 %v2102
  %2236 = vmatpush1.bf16.msra.mxu0 %v2101
  %2237 = vmatprep.subr.bf16.mxu0 %v2104
  %2238 = vmatpush1.bf16.msra.mxu0 %v2103
  %2239 = vmatprep.subr.bf16.mxu0 %v2106
  %2240 = vmatpush1.bf16.msra.mxu0 %v2105
  %2241 = vmatprep.subr.bf16.mxu0 %v2108
  %2242 = vmatpush1.bf16.msra.mxu0 %v2107
  %2243 = vmatprep.subr.bf16.mxu0 %v2110
  %2244 = vmatpush1.bf16.msra.mxu0 %v2109
  %2245 = vmatprep.subr.bf16.mxu0 %v2112
  %2246 = vmatpush1.bf16.msra.mxu0 %v2111
  %2247 = vmatprep.subr.bf16.mxu0 %v2114
  %2248 = vmatpush1.bf16.msra.mxu0 %v2113
  %2249 = vmatprep.subr.bf16.mxu0 %v2116
  %2250 = vmatpush1.bf16.msra.mxu0 %v2115
  %2251 = vmatprep.subr.bf16.mxu0 %v2118
  %2252 = vmatpush1.bf16.msra.mxu0 %v2117
  %2253 = vmatprep.subr.bf16.mxu0 %v2120
  %2254 = vmatpush1.bf16.msra.mxu0 %v2119
  %2255 = vmatprep.subr.bf16.mxu0 %v2122
  %2256 = vmatpush1.bf16.msra.mxu0 %v2121
  %2257 = vmatprep.subr.bf16.mxu0 %v2124
  %2258 = vmatpush1.bf16.msra.mxu0 %v2123
  %2259 = vmatprep.subr.bf16.mxu0 %v2126
  %2260 = vmatpush1.bf16.msra.mxu0 %v2125
  %2261 = vmatprep.mubr.bf16.mxu0 %v1811
  %2262 = vmatmul.mubr.bf16.gmra.mrb[0].mxu0 %v1751
  %v2263 = vpop.f32.mrb[0].mxu0
  %v2264 = vadd.f32 %v1929, %v2263
  %v2265 = vpop.f32.mrb[0].mxu0
  %v2266 = vadd.f32 %v1933, %v2265
  %v2267 = vpop.f32.mrb[0].mxu0
  %v2268 = vadd.f32 %v1929, %v2267
  %v2269 = vpop.f32.mrb[0].mxu0
  %v2270 = vadd.f32 %v1933, %v2269
  %2271 = vmatprep.mubr.bf16.mxu0 %v1814
  %2272 = vmatmul.mubr.bf16.gmra.mrb[0].mxu0 %v1755
  %v2273 = vpop.f32.mrb[0].mxu0
  %v2274 = vadd.f32 %v1929, %v2273
  %v2275 = vpop.f32.mrb[0].mxu0
  %v2276 = vadd.f32 %v1933, %v2275
  %v2277 = vpop.f32.mrb[0].mxu0
  %v2278 = vadd.f32 %v1929, %v2277
  %v2279 = vpop.f32.mrb[0].mxu0
  %v2280 = vadd.f32 %v1933, %v2279
  %2281 = vmatprep.mubr.bf16.mxu0 %v1817
  %2282 = vmatmul.mubr.bf16.gmra.mrb[0].mxu0 %v1759
  %v2283 = vpop.f32.mrb[0].mxu0
  %v2284 = vadd.f32 %v1929, %v2283
  %v2285 = vpop.f32.mrb[0].mxu0
  %v2286 = vadd.f32 %v1933, %v2285
  %v2287 = vpop.f32.mrb[0].mxu0
  %v2288 = vadd.f32 %v1929, %v2287
  %v2289 = vpop.f32.mrb[0].mxu0
  %v2290 = vadd.f32 %v1933, %v2289
  %2291 = vmatprep.mubr.bf16.mxu0 %v1820
  %2292 = vmatmul.mubr.bf16.gmra.mrb[0].mxu0 %v1763
  %v2293 = vpop.f32.mrb[0].mxu0
  %v2294 = vadd.f32 %v1929, %v2293
  %v2295 = vpop.f32.mrb[0].mxu0
  %v2296 = vadd.f32 %v1933, %v2295
  %v2297 = vpop.f32.mrb[0].mxu0
  %v2298 = vadd.f32 %v1929, %v2297
  %v2299 = vpop.f32.mrb[0].mxu0
  %v2300 = vadd.f32 %v1933, %v2299
  %2301 = vmatprep.mubr.bf16.mxu0 %v1823
  %2302 = vmatmul.mubr.bf16.gmra.mrb[0].mxu0 %v1767
  %v2303 = vpop.f32.mrb[0].mxu0
  %v2304 = vadd.f32 %v1929, %v2303
  %v2305 = vpop.f32.mrb[0].mxu0
  %v2306 = vadd.f32 %v1933, %v2305
  %v2307 = vpop.f32.mrb[0].mxu0
  %v2308 = vadd.f32 %v1929, %v2307
  %v2309 = vpop.f32.mrb[0].mxu0
  %v2310 = vadd.f32 %v1933, %v2309
  %2311 = vmatprep.mubr.bf16.mxu0 %v1826
  %2312 = vmatmul.mubr.bf16.gmra.mrb[0].mxu0 %v1771
  %v2313 = vpop.f32.mrb[0].mxu0
  %v2314 = vadd.f32 %v1929, %v2313
  %v2315 = vpop.f32.mrb[0].mxu0
  %v2316 = vadd.f32 %v1933, %v2315
  %v2317 = vpop.f32.mrb[0].mxu0
  %v2318 = vadd.f32 %v1929, %v2317
  %v2319 = vpop.f32.mrb[0].mxu0
  %v2320 = vadd.f32 %v1933, %v2319
  %2321 = vmatprep.mubr.bf16.mxu0 %v1829
  %2322 = vmatmul.mubr.bf16.gmra.mrb[0].mxu0 %v1775
  %v2323 = vpop.f32.mrb[0].mxu0
  %v2324 = vadd.f32 %v1929, %v2323
  %v2325 = vpop.f32.mrb[0].mxu0
  %v2326 = vadd.f32 %v1933, %v2325
  %v2327 = vpop.f32.mrb[0].mxu0
  %v2328 = vadd.f32 %v1929, %v2327
  %v2329 = vpop.f32.mrb[0].mxu0
  %v2330 = vadd.f32 %v1933, %v2329
  %2331 = vmatprep.mubr.bf16.mxu0 %v1832
  %2332 = vmatmul.mubr.bf16.gmra.mrb[0].mxu0 %v1779
  %v2333 = vpop.f32.mrb[0].mxu0
  %v2334 = vadd.f32 %v1929, %v2333
  %v2335 = vpop.f32.mrb[0].mxu0
  %v2336 = vadd.f32 %v1933, %v2335
  %v2337 = vpop.f32.mrb[0].mxu0
  %v2338 = vadd.f32 %v1929, %v2337
  %v2339 = vpop.f32.mrb[0].mxu0
  %v2340 = vadd.f32 %v1933, %v2339
  %2341 = vmatprep.mubr.bf16.mxu0 %v1835
  %2342 = vmatmul.mubr.bf16.gmra.mrb[0].mxu0 %v1783
  %v2343 = vpop.f32.mrb[0].mxu0
  %v2344 = vadd.f32 %v1929, %v2343
  %v2345 = vpop.f32.mrb[0].mxu0
  %v2346 = vadd.f32 %v1933, %v2345
  %v2347 = vpop.f32.mrb[0].mxu0
  %v2348 = vadd.f32 %v1929, %v2347
  %v2349 = vpop.f32.mrb[0].mxu0
  %v2350 = vadd.f32 %v1933, %v2349
  %2351 = vmatprep.mubr.bf16.mxu0 %v1838
  %2352 = vmatmul.mubr.bf16.gmra.mrb[0].mxu0 %v1787
  %v2353 = vpop.f32.mrb[0].mxu0
  %v2354 = vadd.f32 %v1929, %v2353
  %v2355 = vpop.f32.mrb[0].mxu0
  %v2356 = vadd.f32 %v1933, %v2355
  %v2357 = vpop.f32.mrb[0].mxu0
  %v2358 = vadd.f32 %v1929, %v2357
  %v2359 = vpop.f32.mrb[0].mxu0
  %v2360 = vadd.f32 %v1933, %v2359
  %2361 = vdwg.mxu0
  %2362 = vmatprep.subr.bf16.mxu0 %v2128
  %2363 = vmatpush1.bf16.msra.mxu0 %v2127
  %2364 = vmatprep.subr.bf16.mxu0 %v2130
  %2365 = vmatpush1.bf16.msra.mxu0 %v2129
  %2366 = vmatprep.subr.bf16.mxu0 %v2132
  %2367 = vmatpush1.bf16.msra.mxu0 %v2131
  %2368 = vmatprep.subr.bf16.mxu0 %v2134
  %2369 = vmatpush1.bf16.msra.mxu0 %v2133
  %2370 = vmatprep.subr.bf16.mxu0 %v2136
  %2371 = vmatpush1.bf16.msra.mxu0 %v2135
  %2372 = vmatprep.subr.bf16.mxu0 %v2138
  %2373 = vmatpush1.bf16.msra.mxu0 %v2137
  %2374 = vmatprep.subr.bf16.mxu0 %v2140
  %2375 = vmatpush1.bf16.msra.mxu0 %v2139
  %2376 = vmatprep.subr.bf16.mxu0 %v2142
  %2377 = vmatpush1.bf16.msra.mxu0 %v2141
  %2378 = vmatprep.subr.bf16.mxu0 %v2144
  %2379 = vmatpush1.bf16.msra.mxu0 %v2143
  %2380 = vmatprep.subr.bf16.mxu0 %v2146
  %2381 = vmatpush1.bf16.msra.mxu0 %v2145
  %2382 = vmatprep.subr.bf16.mxu0 %v2227
  %2383 = vmatpush1.bf16.msra.mxu0 %v2224
  %2384 = vmatprep.subr.bf16.mxu0 0
  %2385 = vmatpush1.bf16.msra.mxu0 0
  %2386 = vmatprep.subr.bf16.mxu0 0
  %2387 = vmatpush1.bf16.msra.mxu0 0
  %2388 = vmatprep.subr.bf16.mxu0 0
  %2389 = vmatpush1.bf16.msra.mxu0 0
  %2390 = vmatprep.subr.bf16.mxu0 0
  %2391 = vmatpush1.bf16.msra.mxu0 0
  %2392 = vmatprep.subr.bf16.mxu0 0
  %2393 = vmatpush1.bf16.msra.mxu0 0
  %2394 = vmatprep.mubr.bf16.mxu0 %v2202
  %2395 = vmatmul.mubr.bf16.gmra.mrb[0].mxu0 %v1842
  %v2396 = vpop.f32.mrb[0].mxu0
  %v2397 = vadd.f32 %v2264, %v2396
  %v2398 = vpop.f32.mrb[0].mxu0
  %v2399 = vadd.f32 %v2266, %v2398
  %v2400 = vpop.f32.mrb[0].mxu0
  %v2401 = vadd.f32 %v2268, %v2400
  %v2402 = vpop.f32.mrb[0].mxu0
  %v2403 = vadd.f32 %v2270, %v2402
  %2404 = vmatprep.mubr.bf16.mxu0 %v2204
  %2405 = vmatmul.mubr.bf16.gmra.mrb[0].mxu0 %v1845
  %v2406 = vpop.f32.mrb[0].mxu0
  %v2407 = vadd.f32 %v2274, %v2406
  %v2408 = vpop.f32.mrb[0].mxu0
  %v2409 = vadd.f32 %v2276, %v2408
  %v2410 = vpop.f32.mrb[0].mxu0
  %v2411 = vadd.f32 %v2278, %v2410
  %v2412 = vpop.f32.mrb[0].mxu0
  %v2413 = vadd.f32 %v2280, %v2412
  %2414 = vmatprep.mubr.bf16.mxu0 %v2206
  %2415 = vmatmul.mubr.bf16.gmra.mrb[0].mxu0 %v1848
  %v2416 = vpop.f32.mrb[0].mxu0
  %v2417 = vadd.f32 %v2284, %v2416
  %v2418 = vpop.f32.mrb[0].mxu0
  %v2419 = vadd.f32 %v2286, %v2418
  %v2420 = vpop.f32.mrb[0].mxu0
  %v2421 = vadd.f32 %v2288, %v2420
  %v2422 = vpop.f32.mrb[0].mxu0
  %v2423 = vadd.f32 %v2290, %v2422
  %2424 = vmatprep.mubr.bf16.mxu0 %v2208
  %2425 = vmatmul.mubr.bf16.gmra.mrb[0].mxu0 %v1851
  %v2426 = vpop.f32.mrb[0].mxu0
  %v2427 = vadd.f32 %v2294, %v2426
  %v2428 = vpop.f32.mrb[0].mxu0
  %v2429 = vadd.f32 %v2296, %v2428
  %v2430 = vpop.f32.mrb[0].mxu0
  %v2431 = vadd.f32 %v2298, %v2430
  %v2432 = vpop.f32.mrb[0].mxu0
  %v2433 = vadd.f32 %v2300, %v2432
  %2434 = vmatprep.mubr.bf16.mxu0 %v2210
  %2435 = vmatmul.mubr.bf16.gmra.mrb[0].mxu0 %v1854
  %v2436 = vpop.f32.mrb[0].mxu0
  %v2437 = vadd.f32 %v2304, %v2436
  %v2438 = vpop.f32.mrb[0].mxu0
  %v2439 = vadd.f32 %v2306, %v2438
  %v2440 = vpop.f32.mrb[0].mxu0
  %v2441 = vadd.f32 %v2308, %v2440
  %v2442 = vpop.f32.mrb[0].mxu0
  %v2443 = vadd.f32 %v2310, %v2442
  %2444 = vmatprep.mubr.bf16.mxu0 %v2212
  %2445 = vmatmul.mubr.bf16.gmra.mrb[0].mxu0 %v1857
  %v2446 = vpop.f32.mrb[0].mxu0
  %v2447 = vadd.f32 %v2314, %v2446
  %v2448 = vpop.f32.mrb[0].mxu0
  %v2449 = vadd.f32 %v2316, %v2448
  %v2450 = vpop.f32.mrb[0].mxu0
  %v2451 = vadd.f32 %v2318, %v2450
  %v2452 = vpop.f32.mrb[0].mxu0
  %v2453 = vadd.f32 %v2320, %v2452
  %2454 = vmatprep.mubr.bf16.mxu0 %v2214
  %2455 = vmatmul.mubr.bf16.gmra.mrb[0].mxu0 %v1860
  %v2456 = vpop.f32.mrb[0].mxu0
  %v2457 = vadd.f32 %v2324, %v2456
  %v2458 = vpop.f32.mrb[0].mxu0
  %v2459 = vadd.f32 %v2326, %v2458
  %v2460 = vpop.f32.mrb[0].mxu0
  %v2461 = vadd.f32 %v2328, %v2460
  %v2462 = vpop.f32.mrb[0].mxu0
  %v2463 = vadd.f32 %v2330, %v2462
  %2464 = vmatprep.mubr.bf16.mxu0 %v2216
  %2465 = vmatmul.mubr.bf16.gmra.mrb[0].mxu0 %v1863
  %v2466 = vpop.f32.mrb[0].mxu0
  %v2467 = vadd.f32 %v2334, %v2466
  %v2468 = vpop.f32.mrb[0].mxu0
  %v2469 = vadd.f32 %v2336, %v2468
  %v2470 = vpop.f32.mrb[0].mxu0
  %v2471 = vadd.f32 %v2338, %v2470
  %v2472 = vpop.f32.mrb[0].mxu0
  %v2473 = vadd.f32 %v2340, %v2472
  %2474 = vmatprep.mubr.bf16.mxu0 %v2218
  %2475 = vmatmul.mubr.bf16.gmra.mrb[0].mxu0 %v1866
  %v2476 = vpop.f32.mrb[0].mxu0
  %v2477 = vadd.f32 %v2344, %v2476
  %v2478 = vpop.f32.mrb[0].mxu0
  %v2479 = vadd.f32 %v2346, %v2478
  %v2480 = vpop.f32.mrb[0].mxu0
  %v2481 = vadd.f32 %v2348, %v2480
  %v2482 = vpop.f32.mrb[0].mxu0
  %v2483 = vadd.f32 %v2350, %v2482
  %2484 = vmatprep.mubr.bf16.mxu0 %v2220
  %2485 = vmatmul.mubr.bf16.gmra.mrb[0].mxu0 %v1869
  %v2486 = vpop.f32.mrb[0].mxu0
  %v2487 = vadd.f32 %v2354, %v2486
  %v2488 = vpop.f32.mrb[0].mxu0
  %v2489 = vadd.f32 %v2356, %v2488
  %v2490 = vpop.f32.mrb[0].mxu0
  %v2491 = vadd.f32 %v2358, %v2490
  %v2492 = vpop.f32.mrb[0].mxu0
  %v2493 = vadd.f32 %v2360, %v2492
  %2494 = vdwg.mxu0
  %v2495 = vmax.f32 %v2397, 0.0
  %v2496 = vmax.f32 %v2399, 0.0
  %v2497 = vmax.f32 %v2401, 0.0
  %v2498 = vmax.f32 %v2403, 0.0
  %v2499 = vmax.f32 %v2407, 0.0
  %v2500 = vmax.f32 %v2409, 0.0
  %v2501 = vmax.f32 %v2411, 0.0
  %v2502 = vmax.f32 %v2413, 0.0
  %v2503 = vmax.f32 %v2417, 0.0
  %v2504 = vmax.f32 %v2419, 0.0
  %v2505 = vmax.f32 %v2421, 0.0
  %v2506 = vmax.f32 %v2423, 0.0
  %v2507 = vmax.f32 %v2427, 0.0
  %v2508 = vmax.f32 %v2429, 0.0
  %v2509 = vmax.f32 %v2431, 0.0
  %v2510 = vmax.f32 %v2433, 0.0
  %v2511 = vmax.f32 %v2437, 0.0
  %v2512 = vmax.f32 %v2439, 0.0
  %v2513 = vmax.f32 %v2441, 0.0
  %v2514 = vmax.f32 %v2443, 0.0
  %v2515 = vmax.f32 %v2447, 0.0
  %v2516 = vmax.f32 %v2449, 0.0
  %v2517 = vmax.f32 %v2451, 0.0
  %v2518 = vmax.f32 %v2453, 0.0
  %v2519 = vmax.f32 %v2457, 0.0
  %v2520 = vmax.f32 %v2459, 0.0
  %v2521 = vmax.f32 %v2461, 0.0
  %v2522 = vmax.f32 %v2463, 0.0
  %v2523 = vmax.f32 %v2467, 0.0
  %v2524 = vmax.f32 %v2469, 0.0
  %v2525 = vmax.f32 %v2471, 0.0
  %v2526 = vmax.f32 %v2473, 0.0
  %v2527 = vmax.f32 %v2477, 0.0
  %v2528 = vmax.f32 %v2479, 0.0
  %v2529 = vmax.f32 %v2481, 0.0
  %v2530 = vmax.f32 %v2483, 0.0
  %v2531 = vmax.f32 %v2487, 0.0
  %v2532 = vmax.f32 %v2489, 0.0
  %v2533 = vmax.f32 %v2491, 0.0
  %v2534 = vmax.f32 %v2493, 0.0
  %v2535 = vadd.f32 %v2495, %v2499
  %v2536 = vadd.f32 %v2496, %v2500
  %v2537 = vadd.f32 %v2497, %v2501
  %v2538 = vadd.f32 %v2498, %v2502
  %v2539 = vadd.f32 %v2503, %v2507
  %v2540 = vadd.f32 %v2504, %v2508
  %v2541 = vadd.f32 %v2505, %v2509
  %v2542 = vadd.f32 %v2506, %v2510
  %v2543 = vadd.f32 %v2511, %v2515
  %v2544 = vadd.f32 %v2512, %v2516
  %v2545 = vadd.f32 %v2513, %v2517
  %v2546 = vadd.f32 %v2514, %v2518
  %v2547 = vadd.f32 %v2519, %v2523
  %v2548 = vadd.f32 %v2520, %v2524
  %v2549 = vadd.f32 %v2521, %v2525
  %v2550 = vadd.f32 %v2522, %v2526
  %v2551 = vadd.f32 %v2527, %v2531
  %v2552 = vadd.f32 %v2528, %v2532
  %v2553 = vadd.f32 %v2529, %v2533
  %v2554 = vadd.f32 %v2530, %v2534
  %v2555 = vpack.c.bf16 %v2537, %v2535
  %v2556 = vpack.c.bf16 %v2538, %v2536
  %v2557 = vpack.c.bf16 %v2541, %v2539
  %v2558 = vpack.c.bf16 %v2542, %v2540
  %v2559 = vpack.c.bf16 %v2545, %v2543
  %v2560 = vpack.c.bf16 %v2546, %v2544
  %v2561 = vpack.c.bf16 %v2549, %v2547
  %v2562 = vpack.c.bf16 %v2550, %v2548
  %v2563 = vpack.c.bf16 %v2553, %v2551
  %v2564 = vpack.c.bf16 %v2554, %v2552
  %v2565 = vld [vmem:[%s6] sm:$0xf]
  %v2566 = vld [vmem:[%s6 + $0x4] sm:$0xf]
  %v2567 = vld [vmem:[%s6 + $0x8] sm:$0xf]
  %v2568 = vld [vmem:[%s6 + $0xc] sm:$0xf]
  %v2569 = vld [vmem:[%s6 + $0x10] sm:$0xf]
  %v2570 = vld [vmem:[%s6 + $0x14] sm:$0xf]
  %v2571 = vld [vmem:[%s6 + $0x18] sm:$0xf]
  %v2572 = vld [vmem:[%s6 + $0x1c] sm:$0xf]
  %v2573 = vld [vmem:[%s6 + $0x20] sm:$0xf]
  %v2574 = vld [vmem:[%s6 + $0x24] sm:$0xf]
  %v2575 = vld [vmem:[%s6 + $0x28] sm:$0xf]
  %v2576 = vld [vmem:[%s6 + $0x2c] sm:$0xf]
  %v2577 = vld [vmem:[%s6 + $0x30] sm:$0xf]
  %v2578 = vld [vmem:[%s6 + $0x34] sm:$0xf]
  %v2579 = vld [vmem:[%s6 + $0x38] sm:$0xf]
  %v2580 = vld [vmem:[%s6 + $0x3c] sm:$0xf]
  %v2581 = vld [vmem:[%s6 + $0x40] sm:$0xf]
  %v2582 = vld [vmem:[%s6 + $0x44] sm:$0xf]
  %v2583 = vld [vmem:[%s6 + $0x48] sm:$0xf]
  %v2584 = vld [vmem:[%s6 + $0x4c] sm:$0xf]
  %v2605 = vunpack.c.l.b16 %v2565
  %v2606 = vunpack.c.l.b16 %v2566
  %v2607 = vunpack.c.l.b16 %v2567
  %v2608 = vunpack.c.l.b16 %v2568
  %v2609 = vunpack.c.l.b16 %v2569
  %v2610 = vunpack.c.l.b16 %v2570
  %v2611 = vunpack.c.l.b16 %v2571
  %v2612 = vunpack.c.l.b16 %v2572
  %v2613 = vunpack.c.l.b16 %v2573
  %v2614 = vunpack.c.l.b16 %v2574
  %v2615 = vunpack.c.l.b16 %v2575
  %v2616 = vunpack.c.l.b16 %v2576
  %v2617 = vunpack.c.l.b16 %v2577
  %v2618 = vunpack.c.l.b16 %v2578
  %v2619 = vunpack.c.l.b16 %v2579
  %v2620 = vunpack.c.l.b16 %v2580
  %v2621 = vunpack.c.l.b16 %v2581
  %v2622 = vunpack.c.l.b16 %v2582
  %v2623 = vunpack.c.l.b16 %v2583
  %v2624 = vunpack.c.l.b16 %v2584
  %v2625 = vpack.c.b16 %v2606, %v2605
  %v2626 = vpack.c.b16 %v2608, %v2607
  %v2627 = vpack.c.b16 %v2610, %v2609
  %v2628 = vpack.c.b16 %v2612, %v2611
  %v2629 = vpack.c.b16 %v2614, %v2613
  %v2630 = vpack.c.b16 %v2616, %v2615
  %v2631 = vpack.c.b16 %v2618, %v2617
  %v2632 = vpack.c.b16 %v2620, %v2619
  %v2633 = vpack.c.b16 %v2622, %v2621
  %v2634 = vpack.c.b16 %v2624, %v2623
  %v2646 = vsel %vm437, %v2556, 0
  %v2649 = vsel %vm437, %v2558, 0
  %v2652 = vsel %vm437, %v2560, 0
  %v2655 = vsel %vm437, %v2562, 0
  %v2658 = vsel %vm437, %v2564, 0
  %2660 = vmatprep.subr.bf16.mxu0 0
  %2661 = vmatpush1.bf16.msra.mxu0 %v2625
  %2662 = vmatprep.subr.bf16.mxu0 0
  %2663 = vmatpush1.bf16.msra.mxu0 %v2626
  %2664 = vmatprep.subr.bf16.mxu0 0
  %2665 = vmatpush1.bf16.msra.mxu0 %v2627
  %2666 = vmatprep.subr.bf16.mxu0 0
  %2667 = vmatpush1.bf16.msra.mxu0 %v2628
  %2668 = vmatprep.subr.bf16.mxu0 0
  %2669 = vmatpush1.bf16.msra.mxu0 %v2629
  %2670 = vmatprep.subr.bf16.mxu0 0
  %2671 = vmatpush1.bf16.msra.mxu0 %v2630
  %2672 = vmatprep.subr.bf16.mxu0 0
  %2673 = vmatpush1.bf16.msra.mxu0 %v2631
  %2674 = vmatprep.subr.bf16.mxu0 0
  %2675 = vmatpush1.bf16.msra.mxu0 %v2632
  %2676 = vmatprep.subr.bf16.mxu0 0
  %2677 = vmatpush1.bf16.msra.mxu0 %v2633
  %2678 = vmatprep.subr.bf16.mxu0 0
  %2679 = vmatpush1.bf16.msra.mxu0 %v2634
  %2680 = vmatprep.subr.bf16.mxu0 0
  %2681 = vmatpush1.bf16.msra.mxu0 0
  %2682 = vmatprep.subr.bf16.mxu0 0
  %2683 = vmatpush1.bf16.msra.mxu0 0
  %2684 = vmatprep.subr.bf16.mxu0 0
  %2685 = vmatpush1.bf16.msra.mxu0 0
  %2686 = vmatprep.subr.bf16.mxu0 0
  %2687 = vmatpush1.bf16.msra.mxu0 0
  %2688 = vmatprep.subr.bf16.mxu0 0
  %2689 = vmatpush1.bf16.msra.mxu0 0
  %2690 = vmatprep.subr.bf16.mxu0 0
  %2691 = vmatpush1.bf16.msra.mxu0 0
  %2692 = vmatprep.mubr.bf16.mxu0 %v2646
  %2693 = vmatmul.mubr.bf16.gmra.mrb[0].mxu0 %v2555
  %v2694 = vpop.f32.mrb[0].mxu0
  %v2695 = vadd.f32 0.0, %v2694
  %v2696 = vpop.f32.mrb[0].mxu0
  %v2697 = vpop.f32.mrb[0].mxu0
  %v2698 = vadd.f32 0.0, %v2697
  %v2699 = vpop.f32.mrb[0].mxu0
  %2700 = vmatprep.mubr.bf16.mxu0 %v2649
  %2701 = vmatmul.mubr.bf16.gmra.mrb[0].mxu0 %v2557
  %v2702 = vpop.f32.mrb[0].mxu0
  %v2703 = vadd.f32 0.0, %v2702
  %v2704 = vpop.f32.mrb[0].mxu0
  %v2705 = vpop.f32.mrb[0].mxu0
  %v2706 = vadd.f32 0.0, %v2705
  %v2707 = vpop.f32.mrb[0].mxu0
  %2708 = vmatprep.mubr.bf16.mxu0 %v2652
  %2709 = vmatmul.mubr.bf16.gmra.mrb[0].mxu0 %v2559
  %v2710 = vpop.f32.mrb[0].mxu0
  %v2711 = vadd.f32 0.0, %v2710
  %v2712 = vpop.f32.mrb[0].mxu0
  %v2713 = vpop.f32.mrb[0].mxu0
  %v2714 = vadd.f32 0.0, %v2713
  %v2715 = vpop.f32.mrb[0].mxu0
  %2716 = vmatprep.mubr.bf16.mxu0 %v2655
  %2717 = vmatmul.mubr.bf16.gmra.mrb[0].mxu0 %v2561
  %v2718 = vpop.f32.mrb[0].mxu0
  %v2719 = vadd.f32 0.0, %v2718
  %v2720 = vpop.f32.mrb[0].mxu0
  %v2721 = vpop.f32.mrb[0].mxu0
  %v2722 = vadd.f32 0.0, %v2721
  %v2723 = vpop.f32.mrb[0].mxu0
  %2724 = vmatprep.mubr.bf16.mxu0 %v2658
  %2725 = vmatmul.mubr.bf16.gmra.mrb[0].mxu0 %v2563
  %v2726 = vpop.f32.mrb[0].mxu0
  %v2727 = vadd.f32 0.0, %v2726
  %v2728 = vpop.f32.mrb[0].mxu0
  %v2729 = vpop.f32.mrb[0].mxu0
  %v2730 = vadd.f32 0.0, %v2729
  %v2731 = vpop.f32.mrb[0].mxu0
  %2732 = vdwg.mxu0
  %v2733 = vpack.c.bf16 %v2698, %v2695
  %v2734 = vpack.c.bf16 %v2706, %v2703
  %v2735 = vpack.c.bf16 %v2714, %v2711
  %v2736 = vpack.c.bf16 %v2722, %v2719
  %v2737 = vpack.c.bf16 %v2730, %v2727
  %2739 = vrot.lane.b32.xlu0 %v2734, 80
  %v2740 = vpop.permute.xlu0 %2739
  %2742 = vrot.lane.b32.xlu0 %v2735, 32
  %v2743 = vpop.permute.xlu0 %2742
  %2745 = vrot.lane.b32.xlu0 %v2736, 112
  %v2746 = vpop.permute.xlu0 %2745
  %2748 = vrot.lane.b32.xlu0 %v2737, 64
  %v2749 = vpop.permute.xlu0 %2748
  %v2752 = vsel %vm1840, %v2733, %v2740
  %v2755 = vsel %vm437, %v2740, %v2743
  %vm2756 = vcmask 916480
  %v2758 = vsel %vm2756, %v2755, %v2746
  %v2761 = vsel %vm522, %v2746, %v2749
  %v2763 = vld [vmem:[%s7] sm:$0xf]
  %v2764 = vld [vmem:[%s7 + $0x4] sm:$0xf]
  %v2765 = vld [vmem:[%s7 + $0x8] sm:$0xf]
  %v2766 = vld [vmem:[%s7 + $0xc] sm:$0xf]
  %v2767 = vld [vmem:[%s7 + $0x10] sm:$0xf]
  %v2768 = vld [vmem:[%s7 + $0x14] sm:$0xf]
  %v2769 = vld [vmem:[%s7 + $0x18] sm:$0xf]
  %v2770 = vld [vmem:[%s7 + $0x1c] sm:$0xf]
  %v2771 = vld [vmem:[%s7 + $0x20] sm:$0xf]
  %v2772 = vld [vmem:[%s7 + $0x24] sm:$0xf]
  %v2773 = vld [vmem:[%s7 + $0x28] sm:$0xf]
  %v2774 = vld [vmem:[%s7 + $0x2c] sm:$0xf]
  %v2775 = vld [vmem:[%s7 + $0x30] sm:$0xf]
  %v2776 = vld [vmem:[%s7 + $0x34] sm:$0xf]
  %v2777 = vld [vmem:[%s7 + $0x38] sm:$0xf]
  %v2778 = vld [vmem:[%s7 + $0x3c] sm:$0xf]
  %v2779 = vld [vmem:[%s7 + $0x40] sm:$0xf]
  %v2780 = vld [vmem:[%s7 + $0x44] sm:$0xf]
  %v2781 = vld [vmem:[%s7 + $0x48] sm:$0xf]
  %v2782 = vld [vmem:[%s7 + $0x4c] sm:$0xf]
  %v2783 = vld [vmem:[%s7 + $0x50] sm:$0xf]
  %v2784 = vld [vmem:[%s7 + $0x54] sm:$0xf]
  %v2785 = vld [vmem:[%s7 + $0x58] sm:$0xf]
  %v2786 = vld [vmem:[%s7 + $0x5c] sm:$0xf]
  %v2787 = vld [vmem:[%s7 + $0x60] sm:$0xf]
  %v2788 = vld [vmem:[%s7 + $0x64] sm:$0xf]
  %v2789 = vld [vmem:[%s7 + $0x68] sm:$0xf]
  %v2790 = vld [vmem:[%s7 + $0x6c] sm:$0xf]
  %v2791 = vld [vmem:[%s7 + $0x70] sm:$0xf]
  %v2792 = vld [vmem:[%s7 + $0x74] sm:$0xf]
  %v2793 = vld [vmem:[%s7 + $0x78] sm:$0xf]
  %v2794 = vld [vmem:[%s7 + $0x7c] sm:$0xf]
  %v2795 = vld [vmem:[%s7 + $0x80] sm:$0xf]
  %v2796 = vld [vmem:[%s7 + $0x84] sm:$0xf]
  %v2797 = vld [vmem:[%s7 + $0x88] sm:$0xf]
  %v2798 = vld [vmem:[%s7 + $0x8c] sm:$0xf]
  %v2799 = vld [vmem:[%s7 + $0x90] sm:$0xf]
  %v2800 = vld [vmem:[%s7 + $0x94] sm:$0xf]
  %v2801 = vld [vmem:[%s7 + $0x98] sm:$0xf]
  %v2802 = vld [vmem:[%s7 + $0x9c] sm:$0xf]
  %v2803 = vld [vmem:[%s7 + $0xa0] sm:$0xf]
  %v2804 = vld [vmem:[%s7 + $0xa4] sm:$0xf]
  %v2805 = vld [vmem:[%s7 + $0xa8] sm:$0xf]
  %v2806 = vld [vmem:[%s7 + $0xac] sm:$0xf]
  %v2807 = vld [vmem:[%s7 + $0xb0] sm:$0xf]
  %v2808 = vld [vmem:[%s7 + $0xb4] sm:$0xf]
  %v2809 = vld [vmem:[%s7 + $0xb8] sm:$0xf]
  %v2810 = vld [vmem:[%s7 + $0xbc] sm:$0xf]
  %v2811 = vld [vmem:[%s7 + $0xc0] sm:$0xf]
  %v2812 = vld [vmem:[%s7 + $0xc4] sm:$0xf]
  %v2813 = vld [vmem:[%s8] sm:$0x1]
  %v2815 = vlaneseq
  %v2816 = vshrl.u32 %v2815, 7
  %v2817 = vsub.s32 0, %v2816
  %v2818 = vrot.slane %v2813, %v2817
  %v2870 = vunpack.c.l.b16 %v2763
  %v2871 = vunpack.c.l.b16 %v2764
  %v2872 = vunpack.c.l.b16 %v2765
  %v2873 = vunpack.c.l.b16 %v2766
  %v2874 = vunpack.c.l.b16 %v2767
  %v2875 = vunpack.c.l.b16 %v2768
  %v2876 = vunpack.c.l.b16 %v2769
  %v2877 = vunpack.c.l.b16 %v2770
  %v2878 = vunpack.c.l.b16 %v2771
  %v2879 = vunpack.c.l.b16 %v2772
  %v2880 = vunpack.c.l.b16 %v2773
  %v2881 = vunpack.c.l.b16 %v2774
  %v2882 = vunpack.c.l.b16 %v2775
  %v2883 = vunpack.c.l.b16 %v2776
  %v2884 = vunpack.c.l.b16 %v2777
  %v2885 = vunpack.c.l.b16 %v2778
  %v2886 = vunpack.c.l.b16 %v2779
  %v2887 = vunpack.c.l.b16 %v2780
  %v2888 = vunpack.c.l.b16 %v2781
  %v2889 = vunpack.c.l.b16 %v2782
  %v2890 = vunpack.c.l.b16 %v2783
  %v2891 = vunpack.c.l.b16 %v2784
  %v2892 = vunpack.c.l.b16 %v2785
  %v2893 = vunpack.c.l.b16 %v2786
  %v2894 = vunpack.c.l.b16 %v2787
  %v2895 = vunpack.c.l.b16 %v2788
  %v2896 = vunpack.c.l.b16 %v2789
  %v2897 = vunpack.c.l.b16 %v2790
  %v2898 = vunpack.c.l.b16 %v2791
  %v2899 = vunpack.c.l.b16 %v2792
  %v2900 = vunpack.c.l.b16 %v2793
  %v2901 = vunpack.c.l.b16 %v2794
  %v2902 = vunpack.c.l.b16 %v2795
  %v2903 = vunpack.c.l.b16 %v2796
  %v2904 = vunpack.c.l.b16 %v2797
  %v2905 = vunpack.c.l.b16 %v2798
  %v2906 = vunpack.c.l.b16 %v2799
  %v2907 = vunpack.c.l.b16 %v2800
  %v2908 = vunpack.c.l.b16 %v2801
  %v2909 = vunpack.c.l.b16 %v2802
  %v2910 = vunpack.c.l.b16 %v2803
  %v2911 = vunpack.c.l.b16 %v2804
  %v2912 = vunpack.c.l.b16 %v2805
  %v2913 = vunpack.c.l.b16 %v2806
  %v2914 = vunpack.c.l.b16 %v2807
  %v2915 = vunpack.c.l.b16 %v2808
  %v2916 = vunpack.c.l.b16 %v2809
  %v2917 = vunpack.c.l.b16 %v2810
  %v2918 = vunpack.c.l.b16 %v2811
  %v2919 = vunpack.c.l.b16 %v2812
  %v2920 = vpack.c.b16 %v2871, %v2870
  %v2921 = vpack.c.b16 %v2873, %v2872
  %v2922 = vpack.c.b16 %v2875, %v2874
  %v2923 = vpack.c.b16 %v2877, %v2876
  %v2924 = vpack.c.b16 %v2879, %v2878
  %v2925 = vpack.c.b16 %v2881, %v2880
  %v2926 = vpack.c.b16 %v2883, %v2882
  %v2927 = vpack.c.b16 %v2885, %v2884
  %v2928 = vpack.c.b16 %v2887, %v2886
  %v2929 = vpack.c.b16 %v2889, %v2888
  %v2930 = vpack.c.b16 %v2891, %v2890
  %v2931 = vpack.c.b16 %v2893, %v2892
  %v2932 = vpack.c.b16 %v2895, %v2894
  %v2933 = vpack.c.b16 %v2897, %v2896
  %v2934 = vpack.c.b16 %v2899, %v2898
  %v2935 = vpack.c.b16 %v2901, %v2900
  %v2936 = vpack.c.b16 %v2903, %v2902
  %v2937 = vpack.c.b16 %v2905, %v2904
  %v2938 = vpack.c.b16 %v2907, %v2906
  %v2939 = vpack.c.b16 %v2909, %v2908
  %v2940 = vpack.c.b16 %v2911, %v2910
  %v2941 = vpack.c.b16 %v2913, %v2912
  %v2942 = vpack.c.b16 %v2915, %v2914
  %v2943 = vpack.c.b16 %v2917, %v2916
  %v2944 = vpack.c.b16 %v2919, %v2918
  %vm2970 = vcmask 130048
  %v2971 = vsel %vm2970, %v2749, 0
  %2973 = vmatprep.subr.bf16.mxu0 0
  %2974 = vmatpush1.bf16.msra.mxu0 %v2920
  %2975 = vmatprep.subr.bf16.mxu0 0
  %2976 = vmatpush1.bf16.msra.mxu0 %v2921
  %2977 = vmatprep.subr.bf16.mxu0 0
  %2978 = vmatpush1.bf16.msra.mxu0 %v2922
  %2979 = vmatprep.subr.bf16.mxu0 0
  %2980 = vmatpush1.bf16.msra.mxu0 %v2923
  %2981 = vmatprep.subr.bf16.mxu0 0
  %2982 = vmatpush1.bf16.msra.mxu0 %v2924
  %2983 = vmatprep.subr.bf16.mxu0 0
  %2984 = vmatpush1.bf16.msra.mxu0 %v2925
  %2985 = vmatprep.subr.bf16.mxu0 0
  %2986 = vmatpush1.bf16.msra.mxu0 %v2926
  %2987 = vmatprep.subr.bf16.mxu0 0
  %2988 = vmatpush1.bf16.msra.mxu0 %v2927
  %2989 = vmatprep.subr.bf16.mxu0 0
  %2990 = vmatpush1.bf16.msra.mxu0 %v2928
  %2991 = vmatprep.subr.bf16.mxu0 0
  %2992 = vmatpush1.bf16.msra.mxu0 %v2929
  %2993 = vmatprep.subr.bf16.mxu0 0
  %2994 = vmatpush1.bf16.msra.mxu0 %v2930
  %2995 = vmatprep.subr.bf16.mxu0 0
  %2996 = vmatpush1.bf16.msra.mxu0 %v2931
  %2997 = vmatprep.subr.bf16.mxu0 0
  %2998 = vmatpush1.bf16.msra.mxu0 %v2932
  %2999 = vmatprep.subr.bf16.mxu0 0
  %3000 = vmatpush1.bf16.msra.mxu0 %v2933
  %3001 = vmatprep.subr.bf16.mxu0 0
  %3002 = vmatpush1.bf16.msra.mxu0 %v2934
  %3003 = vmatprep.subr.bf16.mxu0 0
  %3004 = vmatpush1.bf16.msra.mxu0 %v2935
  %3005 = vmatprep.mubr.bf16.mxu0 %v2758
  %3006 = vmatmul.mubr.bf16.gmra.mrb[0].mxu0 %v2752
  %v3007 = vpop.f32.mrb[0].mxu0
  %v3008 = vadd.f32 %v2818, %v3007
  %v3009 = vpop.f32.mrb[0].mxu0
  %v3010 = vpop.f32.mrb[0].mxu0
  %v3011 = vadd.f32 %v2818, %v3010
  %v3012 = vpop.f32.mrb[0].mxu0
  %3013 = vdwg.mxu0
  %3014 = vmatprep.subr.bf16.mxu0 0
  %3015 = vmatpush1.bf16.msra.mxu0 %v2936
  %3016 = vmatprep.subr.bf16.mxu0 0
  %3017 = vmatpush1.bf16.msra.mxu0 %v2937
  %3018 = vmatprep.subr.bf16.mxu0 0
  %3019 = vmatpush1.bf16.msra.mxu0 %v2938
  %3020 = vmatprep.subr.bf16.mxu0 0
  %3021 = vmatpush1.bf16.msra.mxu0 %v2939
  %3022 = vmatprep.subr.bf16.mxu0 0
  %3023 = vmatpush1.bf16.msra.mxu0 %v2940
  %3024 = vmatprep.subr.bf16.mxu0 0
  %3025 = vmatpush1.bf16.msra.mxu0 %v2941
  %3026 = vmatprep.subr.bf16.mxu0 0
  %3027 = vmatpush1.bf16.msra.mxu0 %v2942
  %3028 = vmatprep.subr.bf16.mxu0 0
  %3029 = vmatpush1.bf16.msra.mxu0 %v2943
  %3030 = vmatprep.subr.bf16.mxu0 0
  %3031 = vmatpush1.bf16.msra.mxu0 %v2944
  %3032 = vmatprep.subr.bf16.mxu0 0
  %3033 = vmatpush1.bf16.msra.mxu0 0
  %3034 = vmatprep.subr.bf16.mxu0 0
  %3035 = vmatpush1.bf16.msra.mxu0 0
  %3036 = vmatprep.subr.bf16.mxu0 0
  %3037 = vmatpush1.bf16.msra.mxu0 0
  %3038 = vmatprep.subr.bf16.mxu0 0
  %3039 = vmatpush1.bf16.msra.mxu0 0
  %3040 = vmatprep.subr.bf16.mxu0 0
  %3041 = vmatpush1.bf16.msra.mxu0 0
  %3042 = vmatprep.subr.bf16.mxu0 0
  %3043 = vmatpush1.bf16.msra.mxu0 0
  %3044 = vmatprep.subr.bf16.mxu0 0
  %3045 = vmatpush1.bf16.msra.mxu0 0
  %3046 = vmatprep.mubr.bf16.mxu0 %v2971
  %3047 = vmatmul.mubr.bf16.gmra.mrb[0].mxu0 %v2761
  %v3048 = vpop.f32.mrb[0].mxu0
  %v3049 = vadd.f32 %v3008, %v3048
  %v3050 = vpop.f32.mrb[0].mxu0
  %v3051 = vpop.f32.mrb[0].mxu0
  %v3052 = vadd.f32 %v3011, %v3051
  %v3053 = vpop.f32.mrb[0].mxu0
  %3054 = vdwg.mxu0
  %v3055 = vmax.f32 %v3049, 0.0
  %v3056 = vmax.f32 %v3052, 0.0
  %v3057 = vpack.c.bf16 %v3056, %v3055
  %v3058 = vld [vmem:[%s9] sm:$0xf]
  %v3059 = vld [vmem:[%s9 + $0x4] sm:$0xf]
  %v3060 = vld [vmem:[%s9 + $0x8] sm:$0xf]
  %v3061 = vld [vmem:[%s9 + $0xc] sm:$0xf]
  %v3062 = vld [vmem:[%s9 + $0x10] sm:$0xf]
  %v3063 = vld [vmem:[%s9 + $0x14] sm:$0xf]
  %v3064 = vld [vmem:[%s9 + $0x18] sm:$0xf]
  %v3065 = vld [vmem:[%s9 + $0x1c] sm:$0xf]
  %v3066 = vld [vmem:[%s9 + $0x20] sm:$0xf]
  %v3067 = vld [vmem:[%s9 + $0x24] sm:$0xf]
  %v3068 = vld [vmem:[%s9 + $0x28] sm:$0xf]
  %v3069 = vld [vmem:[%s9 + $0x2c] sm:$0xf]
  %v3070 = vld [vmem:[%s9 + $0x30] sm:$0xf]
  %v3071 = vld [vmem:[%s9 + $0x34] sm:$0xf]
  %v3072 = vld [vmem:[%s9 + $0x38] sm:$0xf]
  %v3073 = vld [vmem:[%s10] sm:$0x1]
  %v3075 = vlaneseq
  %v3076 = vshrl.u32 %v3075, 7
  %v3077 = vsub.s32 0, %v3076
  %v3078 = vrot.slane %v3073, %v3077
  %v3095 = vunpack.c.l.b16 %v3058
  %v3096 = vunpack.c.l.b16 %v3059
  %v3097 = vunpack.c.l.b16 %v3060
  %v3098 = vunpack.c.l.b16 %v3061
  %v3099 = vunpack.c.l.b16 %v3062
  %v3100 = vunpack.c.l.b16 %v3063
  %v3101 = vunpack.c.l.b16 %v3064
  %v3102 = vunpack.c.l.b16 %v3065
  %v3103 = vunpack.c.l.b16 %v3066
  %v3104 = vunpack.c.l.b16 %v3067
  %v3105 = vunpack.c.l.b16 %v3068
  %v3106 = vunpack.c.l.b16 %v3069
  %v3107 = vunpack.c.l.b16 %v3070
  %v3108 = vunpack.c.l.b16 %v3071
  %v3109 = vunpack.c.l.b16 %v3072
  %v3110 = vpack.c.b16 %v3096, %v3095
  %v3111 = vpack.c.b16 %v3098, %v3097
  %v3112 = vpack.c.b16 %v3100, %v3099
  %v3113 = vpack.c.b16 %v3102, %v3101
  %v3114 = vpack.c.b16 %v3104, %v3103
  %v3115 = vpack.c.b16 %v3106, %v3105
  %v3116 = vpack.c.b16 %v3108, %v3107
  %v3117 = vpack.c.b16 %v3109, %v3109
  %vm3125 = vcmask 982016
  %v3127 = vsel %vm3125, %v3057, 0
  %v3130 = vsel %vm1492, %v3117, 0
  %3132 = vmatprep.subr.bf16.mxu0 0
  %3133 = vmatpush1.bf16.msra.mxu0 %v3110
  %3134 = vmatprep.subr.bf16.mxu0 0
  %3135 = vmatpush1.bf16.msra.mxu0 %v3111
  %3136 = vmatprep.subr.bf16.mxu0 0
  %3137 = vmatpush1.bf16.msra.mxu0 %v3112
  %3138 = vmatprep.subr.bf16.mxu0 0
  %3139 = vmatpush1.bf16.msra.mxu0 %v3113
  %3140 = vmatprep.subr.bf16.mxu0 0
  %3141 = vmatpush1.bf16.msra.mxu0 %v3114
  %3142 = vmatprep.subr.bf16.mxu0 0
  %3143 = vmatpush1.bf16.msra.mxu0 %v3115
  %3144 = vmatprep.subr.bf16.mxu0 0
  %3145 = vmatpush1.bf16.msra.mxu0 %v3116
  %3146 = vmatprep.subr.bf16.mxu0 0
  %3147 = vmatpush1.bf16.msra.mxu0 %v3130
  %3148 = vmatprep.subr.bf16.mxu0 0
  %3149 = vmatpush1.bf16.msra.mxu0 0
  %3150 = vmatprep.subr.bf16.mxu0 0
  %3151 = vmatpush1.bf16.msra.mxu0 0
  %3152 = vmatprep.subr.bf16.mxu0 0
  %3153 = vmatpush1.bf16.msra.mxu0 0
  %3154 = vmatprep.subr.bf16.mxu0 0
  %3155 = vmatpush1.bf16.msra.mxu0 0
  %3156 = vmatprep.subr.bf16.mxu0 0
  %3157 = vmatpush1.bf16.msra.mxu0 0
  %3158 = vmatprep.subr.bf16.mxu0 0
  %3159 = vmatpush1.bf16.msra.mxu0 0
  %3160 = vmatprep.subr.bf16.mxu0 0
  %3161 = vmatpush1.bf16.msra.mxu0 0
  %3162 = vmatprep.subr.bf16.mxu0 0
  %3163 = vmatpush1.bf16.msra.mxu0 0
  %3164 = vmatprep.mubr.bf16.mxu0 0
  %3165 = vmatmul.mubr.bf16.gmra.mrb[0].mxu0 %v3127
  %v3166 = vpop.f32.mrb[0].mxu0
  %v3167 = vadd.f32 %v3078, %v3166
  %v3168 = vpop.f32.mrb[0].mxu0
  %v3169 = vpop.f32.mrb[0].mxu0
  %v3170 = vadd.f32 %v3078, %v3169
  %v3171 = vpop.f32.mrb[0].mxu0
  %3172 = vdwg.mxu0
  %v3173 = vmax.f32 %v3167, 0.0
  %v3174 = vmax.f32 %v3170, 0.0
  %v3175 = vpack.c.bf16 %v3174, %v3173
  %v3176 = vld [vmem:[%s11] sm:$0xf]
  %v3177 = vld [vmem:[%s11 + $0x4] sm:$0xf]
  %v3178 = vld [vmem:[%s11 + $0x8] sm:$0xf]
  %v3179 = vld [vmem:[%s11 + $0xc] sm:$0xf]
  %v3180 = vld [vmem:[%s11 + $0x10] sm:$0xf]
  %v3181 = vld [vmem:[%s11 + $0x14] sm:$0xf]
  %v3182 = vld [vmem:[%s11 + $0x18] sm:$0xf]
  %v3183 = vld [vmem:[%s11 + $0x1c] sm:$0xf]
  %v3184 = vld [vmem:[%s11 + $0x20] sm:$0xf]
  %v3185 = vld [vmem:[%s11 + $0x24] sm:$0xf]
  %v3186 = vld [vmem:[%s11 + $0x28] sm:$0x3]
  %v3187 = vld [vmem:[%s12] sm:$0x1]
  %v3189 = vlaneseq
  %v3190 = vshrl.u32 %v3189, 7
  %v3191 = vsub.s32 0, %v3190
  %v3192 = vrot.slane %v3187, %v3191
  %v3205 = vunpack.c.l.b16 %v3176
  %v3206 = vunpack.c.l.b16 %v3177
  %v3207 = vunpack.c.l.b16 %v3178
  %v3208 = vunpack.c.l.b16 %v3179
  %v3209 = vunpack.c.l.b16 %v3180
  %v3210 = vunpack.c.l.b16 %v3181
  %v3211 = vunpack.c.l.b16 %v3182
  %v3212 = vunpack.c.l.b16 %v3183
  %v3213 = vunpack.c.l.b16 %v3184
  %v3214 = vunpack.c.l.b16 %v3185
  %v3215 = vunpack.c.l.b16 %v3186
  %v3216 = vpack.c.b16 %v3206, %v3205
  %v3217 = vpack.c.b16 %v3208, %v3207
  %v3218 = vpack.c.b16 %v3210, %v3209
  %v3219 = vpack.c.b16 %v3212, %v3211
  %v3220 = vpack.c.b16 %v3214, %v3213
  %v3221 = vpack.c.b16 %v3215, %v3215
  %v3228 = vsel %vm1748, %v3175, 0
  %v3231 = vsel %vm2222, %v3221, 0
  %3233 = vmatprep.subr.bf16.mxu0 0
  %3234 = vmatpush1.bf16.msra.mxu0 %v3216
  %3235 = vmatprep.subr.bf16.mxu0 0
  %3236 = vmatpush1.bf16.msra.mxu0 %v3217
  %3237 = vmatprep.subr.bf16.mxu0 0
  %3238 = vmatpush1.bf16.msra.mxu0 %v3218
  %3239 = vmatprep.subr.bf16.mxu0 0
  %3240 = vmatpush1.bf16.msra.mxu0 %v3219
  %3241 = vmatprep.subr.bf16.mxu0 0
  %3242 = vmatpush1.bf16.msra.mxu0 %v3220
  %3243 = vmatprep.subr.bf16.mxu0 0
  %3244 = vmatpush1.bf16.msra.mxu0 %v3231
  %3245 = vmatprep.subr.bf16.mxu0 0
  %3246 = vmatpush1.bf16.msra.mxu0 0
  %3247 = vmatprep.subr.bf16.mxu0 0
  %3248 = vmatpush1.bf16.msra.mxu0 0
  %3249 = vmatprep.subr.bf16.mxu0 0
  %3250 = vmatpush1.bf16.msra.mxu0 0
  %3251 = vmatprep.subr.bf16.mxu0 0
  %3252 = vmatpush1.bf16.msra.mxu0 0
  %3253 = vmatprep.subr.bf16.mxu0 0
  %3254 = vmatpush1.bf16.msra.mxu0 0
  %3255 = vmatprep.subr.bf16.mxu0 0
  %3256 = vmatpush1.bf16.msra.mxu0 0
  %3257 = vmatprep.subr.bf16.mxu0 0
  %3258 = vmatpush1.bf16.msra.mxu0 0
  %3259 = vmatprep.subr.bf16.mxu0 0
  %3260 = vmatpush1.bf16.msra.mxu0 0
  %3261 = vmatprep.subr.bf16.mxu0 0
  %3262 = vmatpush1.bf16.msra.mxu0 0
  %3263 = vmatprep.subr.bf16.mxu0 0
  %3264 = vmatpush1.bf16.msra.mxu0 0
  %3265 = vmatprep.mubr.bf16.mxu0 0
  %3266 = vmatmul.mubr.bf16.gmra.mrb[0].mxu0 %v3228
  %v3267 = vpop.f32.mrb[0].mxu0
  %v3268 = vadd.f32 %v3192, %v3267
  %v3269 = vpop.f32.mrb[0].mxu0
  %v3270 = vpop.f32.mrb[0].mxu0
  %v3271 = vadd.f32 %v3192, %v3270
  %v3272 = vpop.f32.mrb[0].mxu0
  %3273 = vdwg.mxu0
  %3274 = vst [vmem:[%s13] sm:$0xff] %v3268
  %3275 = vst [vmem:[%s13 + $0x8] sm:$0xff] %v3271
  // Predicated region
  $region54: #{lenet5_forward.1} parent=0 // pred_check
    _
  $region55: #{lenet5_forward.1} parent=0 // pred_check_branch
    %3277 = sbr.rel (0) target = $region57
  $region56: #{lenet5_forward.1} parent=0 // pred_region
    _
  $region57: #{lenet5_forward.1} parent=0 // pred_fallthru
    _
  // Predicated region
  $region58: #{lenet5_forward.1} parent=0 // pred_check
    _
  $region59: #{lenet5_forward.1} parent=0 // pred_check_branch
    %3279 = sbr.rel (0) target = $region61
  $region60: #{lenet5_forward.1} parent=0 // pred_region
    _
  $region61: #{lenet5_forward.1} parent=0 // pred_fallthru
    _

</llo_original>
